<compile_context>
chip_gen: v5e
topology: v5e:2x2
jax: 0.10.0
libtpu: 0.0.40
codegen_flags: <defaults>
</compile_context>

<pallas_src>
import math
import functools

import jax
import jax.numpy as jnp
from jax.experimental import pallas as pl
from jax.experimental.pallas import tpu as pltpu


def _router_kernel(*refs, num_heads, gb, l_pad, l_real, n_queries, embed_dim,
                   temperature, need_ctx, mm_dtype):
    """One batch-group (gb batch elements) per grid step."""
    if need_ctx:
        (x_ref, qk_ref, gx_ref, bx_ref, wvo_ref, bvo_ref, out_ref, attn_ref) = refs
    else:
        (x_ref, qk_ref, gx_ref, bx_ref, out_ref, attn_ref) = refs
        wvo_ref = bvo_ref = None

    exact = jnp.dtype(mm_dtype) == jnp.dtype(jnp.float32)   # strict-check path

    def _normalize(num, den):
        if exact:
            return num / den
        return num * pl.reciprocal(den, approx=True)         # EUP slot, ~free

    # ---- layer_norm(x) over the whole [gb*Lp, D] slab (one-pass stats, f32 math) ----
    x2 = x_ref[...].astype(jnp.float32)
    mu = jnp.mean(x2, axis=-1, keepdims=True)
    var = jnp.mean(x2 * x2, axis=-1, keepdims=True) - mu * mu
    x_n = (x2 - mu) * jax.lax.rsqrt(var + 1e-5) * gx_ref[...] + bx_ref[...]
    xm = x_n.astype(mm_dtype)                                 # [gb*Lp, D]

    if l_pad != l_real:
        col = jax.lax.broadcasted_iota(jnp.int32, (n_queries, l_pad), 1)
        pad_mask = col < l_real
    else:
        pad_mask = None

    inv_h = 1.0 / num_heads
    for g in range(gb):                        # static unroll (gb kept small by wrapper)
        lo = g * l_pad
        xg = xm[lo:lo + l_pad]                 # [Lp, D] sublane-aligned slice
        attn_sum = jnp.zeros((n_queries, l_pad), jnp.float32)
        ctx_out = jnp.zeros((n_queries, embed_dim), jnp.float32) if need_ctx else None
        for h in range(num_heads):             # static unroll (num_heads is small)
            # K-eliminated scores: qk_ref[h] already carries LN->Wq->scale->Wk_h^T.
            s = jax.lax.dot_general(qk_ref[h], xg, (((1,), (1,)), ((), ())),
                                    preferred_element_type=jnp.float32)   # [NP, Lp]
            if pad_mask is not None:
                s = jnp.where(pad_mask, s, -jnp.inf)
            s = s - jnp.max(s, axis=-1, keepdims=True)
            p = jnp.exp(s)
            p = _normalize(p, jnp.sum(p, axis=-1, keepdims=True))
            attn_sum = attn_sum + p
            if need_ctx:
                # folded V/out projection: (P_h @ xn) @ (Wv_h @ Wo_h); bias folded into bvo.
                t = jnp.dot(p.astype(mm_dtype), xg,
                            preferred_element_type=jnp.float32)           # [NP, D]
                ctx_out = ctx_out + jnp.dot(t.astype(mm_dtype), wvo_ref[h],
                                            preferred_element_type=jnp.float32)
        attn = attn_sum * inv_h                # head-averaged weights [NP, Lp]
        if need_ctx:
            out_g = ctx_out + bvo_ref[...]
        else:
            # temperature re-softmax; out is attn @ x_norm, so the ctx chain is statically
            # skipped (and wvo/bvo are not even operands of this kernel variant).
            logit = (jnp.log(attn) + 1e-9) * (1.0 / temperature)
            logit = logit - jnp.max(logit, axis=-1, keepdims=True)
            e = jnp.exp(logit)
            attn = _normalize(e, jnp.sum(e, axis=-1, keepdims=True))
            out_g = jnp.dot(attn.astype(mm_dtype), xg, preferred_element_type=jnp.float32)
        out_ref[g] = out_g.astype(out_ref.dtype)
        attn_ref[g] = attn.astype(attn_ref.dtype)


def cross_attention_router(x, params, *, num_nodes, partition_length, num_heads,
                           temperature=1.0, mm_dtype=jnp.bfloat16,
                           out_dtype=jnp.float32, group_batch=None):
    """Pallas forward. Returns (node_repr [B,N,P,D], attn [B,N*P,L])."""
    B, L, D = x.shape
    N, P = num_nodes, partition_length
    NP = N * P
    hd = D // num_heads
    Lp = ((L + 127) // 128) * 128                     # lane-dense attention / seq dim
    need_ctx = (float(temperature) == 1.0)
    mm_bytes = jnp.dtype(mm_dtype).itemsize
    out_bytes = jnp.dtype(out_dtype).itemsize

    # ---- lane-dense seq dim: zero-pad L (masked in-kernel), flatten, stream in mm_dtype ----
    x_p = x if Lp == L else jnp.pad(x, ((0, 0), (0, Lp - L), (0, 0)))
    x2 = x_p.reshape(B * Lp, D).astype(mm_dtype)

    # ---- batch-invariant query path + K elimination (one-time XLA in the wrapper) ----
    qf = params["queries"].reshape(NP, D).astype(jnp.float32)
    mu = qf.mean(-1, keepdims=True)
    var = ((qf - mu) ** 2).mean(-1, keepdims=True)
    qn = (qf - mu) / jnp.sqrt(var + 1e-5) * params["gq"].reshape(D) + params["bq_ln"].reshape(D)
    q_proj = (qn @ params["wq"] + params["bq"].reshape(D)) * (1.0 / math.sqrt(hd))
    q_heads = q_proj.reshape(NP, num_heads, hd).transpose(1, 0, 2)          # [H, NP, hd]
    wk_heads = params["wk"].reshape(D, num_heads, hd).transpose(1, 0, 2)    # [H, D, hd]
    qk = jnp.einsum("hqe,hde->hqd", q_heads, wk_heads).astype(mm_dtype)     # [H, NP, D]
    # bk cancels in softmax (per-query constant over keys) -> dropped.

    gx = params["gx"].reshape(1, D).astype(jnp.float32)
    bx = params["bx_ln"].reshape(1, D).astype(jnp.float32)

    if need_ctx:
        wv_heads = params["wv"].reshape(D, num_heads, hd).transpose(1, 0, 2)    # [H, D, hd]
        wo_heads = params["wo"].reshape(num_heads, hd, D)                       # [H, hd, D]
        wvo = jnp.einsum("hde,heo->hdo", wv_heads, wo_heads).astype(mm_dtype)   # [H, D, D]
        # softmax rows sum to 1 -> V bias collapses to a constant output vector.
        bvo = (params["bv"].reshape(1, D) @ params["wo"]
               + params["bo"].reshape(1, D)).astype(jnp.float32)                # [1, D]

    # ---- generation-aware VMEM budget ----
    try:
        info = pltpu.get_tpu_info()
        phys_vmem = int(getattr(info, "vmem_capacity_bytes", 0)) or (64 << 20)
    except Exception:
        phys_vmem = 64 << 20                                  # conservative (v7x) fallback
    vmem_cap = int(0.75 * phys_vmem)

    def _vmem_est(gb_):
        xblk = gb_ * Lp * D * mm_bytes * 2                    # streamed x (double-buffered)
        oblk = gb_ * NP * (D + Lp) * out_bytes * 2            # output blocks (double-buffered)
        rep = num_heads * NP * D * mm_bytes + 3 * D * 4       # qk + gamma/beta
        if need_ctx:
            rep += num_heads * D * D * mm_bytes + D * 4       # wvo + bvo
        rep *= 2                                              # replicated blocks double-buffered
        tmp = gb_ * Lp * D * (8 + mm_bytes)                   # x f32 / x_norm f32 / xm slabs
        tmp += NP * Lp * 4 * 6 + NP * D * 4 * 4               # per-step score/prob transients
        return xblk + oblk + rep + tmp + (2 << 20)            # + slack

    # ---- batch grouping: >=512 rows per block, >=2 grid steps, VMEM-feasible ----
    if group_batch is None:
        divs = [d for d in range(1, B + 1) if B % d == 0]
        feasible = [d for d in divs if _vmem_est(d) <= int(0.6 * phys_vmem)] or [1]
        multi = [d for d in feasible if B // d >= 2] or feasible
        target = [d for d in multi if d * Lp >= 512]
        gb = min(target) if target else max(multi)
    else:
        gb = int(group_batch)
    assert B % gb == 0, "group_batch must divide the batch size"
    grid = (B // gb,)

    kernel = functools.partial(
        _router_kernel, num_heads=num_heads, gb=gb, l_pad=Lp, l_real=L,
        n_queries=NP, embed_dim=D, temperature=float(temperature),
        need_ctx=need_ctx, mm_dtype=mm_dtype)

    rep2 = lambda i: (0, 0)
    rep3 = lambda i: (0, 0, 0)
    in_specs = [
        pl.BlockSpec((gb * Lp, D), lambda i: (i, 0)),            # streamed x slab
        pl.BlockSpec((num_heads, NP, D), rep3),                  # Q~ (LN->Wq->scale->Wk^T)
        pl.BlockSpec((1, D), rep2), pl.BlockSpec((1, D), rep2),  # norm_x gamma / beta
    ]
    operands = [x2, qk, gx, bx]
    if need_ctx:
        in_specs += [pl.BlockSpec((num_heads, D, D), rep3),      # Wvo = Wv_h @ Wo_h
                     pl.BlockSpec((1, D), rep2)]                 # bvo = bv @ Wo + bo
        operands += [wvo, bvo]
    out_specs = (
        pl.BlockSpec((gb, NP, D), lambda i: (i, 0, 0)),
        pl.BlockSpec((gb, NP, Lp), lambda i: (i, 0, 0)),         # lane-dense attn slab
    )
    out_shape = (
        jax.ShapeDtypeStruct((B, NP, D), out_dtype),
        jax.ShapeDtypeStruct((B, NP, Lp), out_dtype),
    )

    cp = dict(dimension_semantics=("parallel",))
    need = _vmem_est(gb)
    if need > (12 << 20):
        cp["vmem_limit_bytes"] = min(max(int(1.5 * need), 32 << 20), vmem_cap)

    out, attn_full = pl.pallas_call(
        kernel, grid=grid, in_specs=in_specs, out_specs=out_specs, out_shape=out_shape,
        compiler_params=pltpu.CompilerParams(**cp),
    )(*operands)

    node_repr = out.reshape(B, N, P, D)
    attn = attn_full if Lp == L else attn_full[:, :, :L]
    return node_repr, attn


def reference_router(x, params, *, num_nodes, partition_length,
                     num_heads, temperature=1.0):
    """Pure-JAX reference mirroring the PyTorch forward (eval mode)."""
    B, L, D = x.shape
    N, P = num_nodes, partition_length
    NP = N * P
    hd = D // num_heads

    def ln(z, g, b):
        mu = z.mean(-1, keepdims=True)
        var = ((z - mu) ** 2).mean(-1, keepdims=True)
        return (z - mu) / jnp.sqrt(var + 1e-5) * g + b

    q = jnp.broadcast_to(params["queries"].reshape(1, NP, D), (B, NP, D))
    qn = ln(q, params["gq"][0], params["bq_ln"][0])
    xn = ln(x, params["gx"][0], params["bx_ln"][0])
    Q = qn @ params["wq"] + params["bq"][0]
    K = xn @ params["wk"] + params["bk"][0]
    V = xn @ params["wv"] + params["bv"][0]
    Qh = Q.reshape(B, NP, num_heads, hd).transpose(0, 2, 1, 3)
    Kh = K.reshape(B, L, num_heads, hd).transpose(0, 2, 1, 3)
    Vh = V.reshape(B, L, num_heads, hd).transpose(0, 2, 1, 3)
    S = jnp.einsum("bhqd,bhkd->bhqk", Qh, Kh) / math.sqrt(hd)
    A = jax.nn.softmax(S, axis=-1)
    ctx = jnp.einsum("bhqk,bhkd->bhqd", A, Vh).transpose(0, 2, 1, 3).reshape(B, NP, D)
    out = ctx @ params["wo"] + params["bo"][0]
    attn = A.mean(axis=1)
    if temperature != 1.0:
        attn = jax.nn.softmax((jnp.log(attn) + 1e-9) / temperature, axis=-1)
        out = attn @ xn
    return out.reshape(B, N, P, D), attn


def init_params(key, *, num_nodes, partition_length, embedding_dim):
    """Deterministic synthetic parameters (shapes match the PyTorch module)."""
    D = embedding_dim
    ks = jax.random.split(key, 9)
    s = 1.0 / math.sqrt(D)
    return {
        "queries": jax.random.normal(ks[0], (num_nodes, partition_length, D), jnp.float32),
        "gq": jnp.ones((1, D), jnp.float32), "bq_ln": jnp.zeros((1, D), jnp.float32),
        "gx": jnp.ones((1, D), jnp.float32), "bx_ln": jnp.zeros((1, D), jnp.float32),
        # stored (in, out): y = x @ W + b
        "wq": jax.random.uniform(ks[1], (D, D), jnp.float32, -s, s),
        "wk": jax.random.uniform(ks[2], (D, D), jnp.float32, -s, s),
        "wv": jax.random.uniform(ks[3], (D, D), jnp.float32, -s, s),
        "bq": jax.random.uniform(ks[4], (1, D), jnp.float32, -s, s),
        "bk": jax.random.uniform(ks[5], (1, D), jnp.float32, -s, s),
        "bv": jax.random.uniform(ks[6], (1, D), jnp.float32, -s, s),
        "wo": jax.random.uniform(ks[7], (D, D), jnp.float32, -s, s),
        "bo": jax.random.uniform(ks[8], (1, D), jnp.float32, -s, s),
    }


if __name__ == "__main__":
    # Small shapes consistent with the module's forward: x [B, L, D]
    B, L, D = 2, 16, 32
    N, P, H = 2, 4, 4

    key = jax.random.PRNGKey(0)
    kx, kp = jax.random.split(key)
    x = jax.random.normal(kx, (B, L, D), jnp.float32)
    params = init_params(kp, num_nodes=N, partition_length=P, embedding_dim=D)

    # ---- strict check in f32 (temperature == 1.0 path; exact softmax division) ----
    node_repr, attn = cross_attention_router(
        x, params, num_nodes=N, partition_length=P, num_heads=H,
        temperature=1.0, mm_dtype=jnp.float32)
    node_repr = jax.block_until_ready(node_repr)
    attn = jax.block_until_ready(attn)
    ref_repr, ref_attn = reference_router(
        x, params, num_nodes=N, partition_length=P, num_heads=H, temperature=1.0)
    assert node_repr.shape == (B, N, P, D)
    assert attn.shape == (B, N * P, L)
    assert jnp.allclose(node_repr, ref_repr, atol=2e-3, rtol=2e-3)
    assert jnp.allclose(attn, ref_attn, atol=2e-3, rtol=2e-3)

    # ---- strict check in f32 (temperature != 1.0: wvo/bvo dropped from operands) ----
    nr_t, at_t = cross_attention_router(
        x, params, num_nodes=N, partition_length=P, num_heads=H,
        temperature=2.0, mm_dtype=jnp.float32)
    nr_t = jax.block_until_ready(nr_t)
    at_t = jax.block_until_ready(at_t)
    rr_t, ra_t = reference_router(
        x, params, num_nodes=N, partition_length=P, num_heads=H, temperature=2.0)
    assert jnp.allclose(nr_t, rr_t, atol=2e-3, rtol=2e-3)
    assert jnp.allclose(at_t, ra_t, atol=2e-3, rtol=2e-3)

    # ---- default bf16 fast path (bf16-streamed x, approx reciprocal): loose check ----
    nr_b, at_b = cross_attention_router(
        x, params, num_nodes=N, partition_length=P, num_heads=H, temperature=1.0)
    nr_b = jax.block_until_ready(nr_b)
    at_b = jax.block_until_ready(at_b)
    assert bool(jnp.all(jnp.isfinite(nr_b))) and bool(jnp.all(jnp.isfinite(at_b)))
    assert jnp.allclose(nr_b, ref_repr, atol=1e-1, rtol=1e-1)
    assert jnp.allclose(at_b, ref_attn, atol=5e-2, rtol=5e-2)

    print("KERNEL_OK")
</pallas_src>

<mosaic_0001>
module attributes {stable_mosaic.version = 11 : i64} {
  func.func @_router_kernel(%arg0: i32, %arg1: memref<128x32xf32, #tpu.memory_space<vmem>>, %arg2: memref<4x8x32xf32, #tpu.memory_space<vmem>>, %arg3: memref<1x32xf32, #tpu.memory_space<vmem>>, %arg4: memref<1x32xf32, #tpu.memory_space<vmem>>, %arg5: memref<4x32x32xf32, #tpu.memory_space<vmem>>, %arg6: memref<1x32xf32, #tpu.memory_space<vmem>>, %arg7: memref<1x8x32xf32, #tpu.memory_space<vmem>>, %arg8: memref<1x8x128xf32, #tpu.memory_space<vmem>>) attributes {dimension_semantics = [#tpu.dimension_semantics<parallel>], iteration_bounds = array<i64: 2>, scalar_prefetch = 0 : i64, scratch_operands = 0 : i64, tpu.core_type = #tpu.core_type<tc>, window_params = [{transform_indices = @transform_0, window_bounds = array<i64: 128, 32>}, {pipeline_mode = #tpu.pipeline_mode<synchronous>, transform_indices = @transform_1, window_bounds = array<i64: 4, 8, 32>}, {pipeline_mode = #tpu.pipeline_mode<synchronous>, transform_indices = @transform_2, window_bounds = array<i64: 1, 32>}, {pipeline_mode = #tpu.pipeline_mode<synchronous>, transform_indices = @transform_3, window_bounds = array<i64: 1, 32>}, {pipeline_mode = #tpu.pipeline_mode<synchronous>, transform_indices = @transform_4, window_bounds = array<i64: 4, 32, 32>}, {pipeline_mode = #tpu.pipeline_mode<synchronous>, transform_indices = @transform_5, window_bounds = array<i64: 1, 32>}, {transform_indices = @transform_6, window_bounds = array<i64: 1, 8, 32>}, {transform_indices = @transform_7, window_bounds = array<i64: 1, 8, 128>}]} {
    %c0 = arith.constant 0 : index
    %c0_0 = arith.constant 0 : index
    %0 = vector.load %arg1[%c0, %c0_0] : memref<128x32xf32, #tpu.memory_space<vmem>>, vector<128x32xf32>
    %cst = arith.constant dense<0.000000e+00> : vector<128xf32>
    %1 = vector.multi_reduction <add>, %0, %cst [1] : vector<128x32xf32> to vector<128xf32>
    %2 = vector.shape_cast %1 : vector<128xf32> to vector<128x1xf32>
    %cst_1 = arith.constant 3.200000e+01 : f32
    %3 = vector.broadcast %cst_1 : f32 to vector<128x1xf32>
    %4 = arith.divf %2, %3 : vector<128x1xf32>
    %5 = arith.mulf %0, %0 : vector<128x32xf32>
    %cst_2 = arith.constant dense<0.000000e+00> : vector<128xf32>
    %6 = vector.multi_reduction <add>, %5, %cst_2 [1] : vector<128x32xf32> to vector<128xf32>
    %7 = vector.shape_cast %6 : vector<128xf32> to vector<128x1xf32>
    %cst_3 = arith.constant 3.200000e+01 : f32
    %8 = vector.broadcast %cst_3 : f32 to vector<128x1xf32>
    %9 = arith.divf %7, %8 : vector<128x1xf32>
    %10 = arith.mulf %4, %4 : vector<128x1xf32>
    %11 = arith.subf %9, %10 : vector<128x1xf32>
    %12 = vector.broadcast %4 : vector<128x1xf32> to vector<128x32xf32>
    %13 = arith.subf %0, %12 : vector<128x32xf32>
    %cst_4 = arith.constant 9.99999974E-6 : f32
    %14 = vector.broadcast %cst_4 : f32 to vector<128x1xf32>
    %15 = arith.addf %11, %14 : vector<128x1xf32>
    %16 = math.rsqrt %15 : vector<128x1xf32>
    %17 = vector.broadcast %16 : vector<128x1xf32> to vector<128x32xf32>
    %18 = arith.mulf %13, %17 : vector<128x32xf32>
    %c0_5 = arith.constant 0 : index
    %c0_6 = arith.constant 0 : index
    %19 = vector.load %arg3[%c0_5, %c0_6] : memref<1x32xf32, #tpu.memory_space<vmem>>, vector<1x32xf32>
    %20 = vector.broadcast %19 : vector<1x32xf32> to vector<128x32xf32>
    %21 = arith.mulf %18, %20 : vector<128x32xf32>
    %c0_7 = arith.constant 0 : index
    %c0_8 = arith.constant 0 : index
    %22 = vector.load %arg4[%c0_7, %c0_8] : memref<1x32xf32, #tpu.memory_space<vmem>>, vector<1x32xf32>
    %23 = vector.broadcast %22 : vector<1x32xf32> to vector<128x32xf32>
    %24 = arith.addf %21, %23 : vector<128x32xf32>
    %25 = tpu.iota {dimensions = array<i32: 1>} : vector<8x128xi32>
    %c16_i32 = arith.constant 16 : i32
    %26 = vector.broadcast %c16_i32 : i32 to vector<8x128xi32>
    %27 = arith.cmpi slt, %25, %26 : vector<8x128xi32>
    %cst_9 = arith.constant 0.000000e+00 : f32
    %28 = vector.broadcast %cst_9 : f32 to vector<8x128xf32>
    %cst_10 = arith.constant 0.000000e+00 : f32
    %29 = vector.broadcast %cst_10 : f32 to vector<8x32xf32>
    %c0_11 = arith.constant 0 : index
    %c0_12 = arith.constant 0 : index
    %c0_13 = arith.constant 0 : index
    %30 = vector.load %arg2[%c0_11, %c0_12, %c0_13] : memref<4x8x32xf32, #tpu.memory_space<vmem>>, vector<1x8x32xf32>
    %31 = vector.shape_cast %30 : vector<1x8x32xf32> to vector<8x32xf32>
    %cst_14 = arith.constant dense<0.000000e+00> : vector<8x128xf32>
    %32 = tpu.matmul %31, %24, %cst_14 {dimension_numbers = #tpu.dot_dimension_numbers<[1], [1], [0], [0], [0, 0, 1, 0], [], []>} : vector<8x32xf32>, vector<128x32xf32>, vector<8x128xf32> -> vector<8x128xf32>
    %cst_15 = arith.constant 0xFF800000 : f32
    %33 = vector.broadcast %cst_15 : f32 to vector<8x128xf32>
    %34 = arith.select %27, %32, %33 : vector<8x128xi1>, vector<8x128xf32>
    %cst_16 = arith.constant dense<0xFF800000> : vector<8xf32>
    %35 = vector.multi_reduction <maximumf>, %34, %cst_16 [1] : vector<8x128xf32> to vector<8xf32>
    %36 = vector.shape_cast %35 : vector<8xf32> to vector<8x1xf32>
    %37 = vector.broadcast %36 : vector<8x1xf32> to vector<8x128xf32>
    %38 = arith.subf %34, %37 : vector<8x128xf32>
    %39 = math.exp %38 : vector<8x128xf32>
    %cst_17 = arith.constant dense<0.000000e+00> : vector<8xf32>
    %40 = vector.multi_reduction <add>, %39, %cst_17 [1] : vector<8x128xf32> to vector<8xf32>
    %41 = vector.shape_cast %40 : vector<8xf32> to vector<8x1xf32>
    %42 = vector.broadcast %41 : vector<8x1xf32> to vector<8x128xf32>
    %43 = arith.divf %39, %42 : vector<8x128xf32>
    %44 = arith.addf %28, %43 : vector<8x128xf32>
    %cst_18 = arith.constant dense<0.000000e+00> : vector<8x32xf32>
    %45 = tpu.matmul %43, %24, %cst_18 {dimension_numbers = #tpu.dot_dimension_numbers<[1], [0], [0], [1], [0, 0, 1, 1], [], []>} : vector<8x128xf32>, vector<128x32xf32>, vector<8x32xf32> -> vector<8x32xf32>
    %c0_19 = arith.constant 0 : index
    %c0_20 = arith.constant 0 : index
    %c0_21 = arith.constant 0 : index
    %46 = vector.load %arg5[%c0_19, %c0_20, %c0_21] : memref<4x32x32xf32, #tpu.memory_space<vmem>>, vector<1x32x32xf32>
    %47 = vector.shape_cast %46 : vector<1x32x32xf32> to vector<32x32xf32>
    %cst_22 = arith.constant dense<0.000000e+00> : vector<8x32xf32>
    %48 = tpu.matmul %45, %47, %cst_22 {dimension_numbers = #tpu.dot_dimension_numbers<[1], [0], [0], [1], [0, 0, 1, 1], [], []>} : vector<8x32xf32>, vector<32x32xf32>, vector<8x32xf32> -> vector<8x32xf32>
    %49 = arith.addf %29, %48 : vector<8x32xf32>
    %c1 = arith.constant 1 : index
    %c0_23 = arith.constant 0 : index
    %c0_24 = arith.constant 0 : index
    %50 = vector.load %arg2[%c1, %c0_23, %c0_24] : memref<4x8x32xf32, #tpu.memory_space<vmem>>, vector<1x8x32xf32>
    %51 = vector.shape_cast %50 : vector<1x8x32xf32> to vector<8x32xf32>
    %cst_25 = arith.constant dense<0.000000e+00> : vector<8x128xf32>
    %52 = tpu.matmul %51, %24, %cst_25 {dimension_numbers = #tpu.dot_dimension_numbers<[1], [1], [0], [0], [0, 0, 1, 0], [], []>} : vector<8x32xf32>, vector<128x32xf32>, vector<8x128xf32> -> vector<8x128xf32>
    %cst_26 = arith.constant 0xFF800000 : f32
    %53 = vector.broadcast %cst_26 : f32 to vector<8x128xf32>
    %54 = arith.select %27, %52, %53 : vector<8x128xi1>, vector<8x128xf32>
    %cst_27 = arith.constant dense<0xFF800000> : vector<8xf32>
    %55 = vector.multi_reduction <maximumf>, %54, %cst_27 [1] : vector<8x128xf32> to vector<8xf32>
    %56 = vector.shape_cast %55 : vector<8xf32> to vector<8x1xf32>
    %57 = vector.broadcast %56 : vector<8x1xf32> to vector<8x128xf32>
    %58 = arith.subf %54, %57 : vector<8x128xf32>
    %59 = math.exp %58 : vector<8x128xf32>
    %cst_28 = arith.constant dense<0.000000e+00> : vector<8xf32>
    %60 = vector.multi_reduction <add>, %59, %cst_28 [1] : vector<8x128xf32> to vector<8xf32>
    %61 = vector.shape_cast %60 : vector<8xf32> to vector<8x1xf32>
    %62 = vector.broadcast %61 : vector<8x1xf32> to vector<8x128xf32>
    %63 = arith.divf %59, %62 : vector<8x128xf32>
    %64 = arith.addf %44, %63 : vector<8x128xf32>
    %cst_29 = arith.constant dense<0.000000e+00> : vector<8x32xf32>
    %65 = tpu.matmul %63, %24, %cst_29 {dimension_numbers = #tpu.dot_dimension_numbers<[1], [0], [0], [1], [0, 0, 1, 1], [], []>} : vector<8x128xf32>, vector<128x32xf32>, vector<8x32xf32> -> vector<8x32xf32>
    %c1_30 = arith.constant 1 : index
    %c0_31 = arith.constant 0 : index
    %c0_32 = arith.constant 0 : index
    %66 = vector.load %arg5[%c1_30, %c0_31, %c0_32] : memref<4x32x32xf32, #tpu.memory_space<vmem>>, vector<1x32x32xf32>
    %67 = vector.shape_cast %66 : vector<1x32x32xf32> to vector<32x32xf32>
    %cst_33 = arith.constant dense<0.000000e+00> : vector<8x32xf32>
    %68 = tpu.matmul %65, %67, %cst_33 {dimension_numbers = #tpu.dot_dimension_numbers<[1], [0], [0], [1], [0, 0, 1, 1], [], []>} : vector<8x32xf32>, vector<32x32xf32>, vector<8x32xf32> -> vector<8x32xf32>
    %69 = arith.addf %49, %68 : vector<8x32xf32>
    %c2 = arith.constant 2 : index
    %c0_34 = arith.constant 0 : index
    %c0_35 = arith.constant 0 : index
    %70 = vector.load %arg2[%c2, %c0_34, %c0_35] : memref<4x8x32xf32, #tpu.memory_space<vmem>>, vector<1x8x32xf32>
    %71 = vector.shape_cast %70 : vector<1x8x32xf32> to vector<8x32xf32>
    %cst_36 = arith.constant dense<0.000000e+00> : vector<8x128xf32>
    %72 = tpu.matmul %71, %24, %cst_36 {dimension_numbers = #tpu.dot_dimension_numbers<[1], [1], [0], [0], [0, 0, 1, 0], [], []>} : vector<8x32xf32>, vector<128x32xf32>, vector<8x128xf32> -> vector<8x128xf32>
    %cst_37 = arith.constant 0xFF800000 : f32
    %73 = vector.broadcast %cst_37 : f32 to vector<8x128xf32>
    %74 = arith.select %27, %72, %73 : vector<8x128xi1>, vector<8x128xf32>
    %cst_38 = arith.constant dense<0xFF800000> : vector<8xf32>
    %75 = vector.multi_reduction <maximumf>, %74, %cst_38 [1] : vector<8x128xf32> to vector<8xf32>
    %76 = vector.shape_cast %75 : vector<8xf32> to vector<8x1xf32>
    %77 = vector.broadcast %76 : vector<8x1xf32> to vector<8x128xf32>
    %78 = arith.subf %74, %77 : vector<8x128xf32>
    %79 = math.exp %78 : vector<8x128xf32>
    %cst_39 = arith.constant dense<0.000000e+00> : vector<8xf32>
    %80 = vector.multi_reduction <add>, %79, %cst_39 [1] : vector<8x128xf32> to vector<8xf32>
    %81 = vector.shape_cast %80 : vector<8xf32> to vector<8x1xf32>
    %82 = vector.broadcast %81 : vector<8x1xf32> to vector<8x128xf32>
    %83 = arith.divf %79, %82 : vector<8x128xf32>
    %84 = arith.addf %64, %83 : vector<8x128xf32>
    %cst_40 = arith.constant dense<0.000000e+00> : vector<8x32xf32>
    %85 = tpu.matmul %83, %24, %cst_40 {dimension_numbers = #tpu.dot_dimension_numbers<[1], [0], [0], [1], [0, 0, 1, 1], [], []>} : vector<8x128xf32>, vector<128x32xf32>, vector<8x32xf32> -> vector<8x32xf32>
    %c2_41 = arith.constant 2 : index
    %c0_42 = arith.constant 0 : index
    %c0_43 = arith.constant 0 : index
    %86 = vector.load %arg5[%c2_41, %c0_42, %c0_43] : memref<4x32x32xf32, #tpu.memory_space<vmem>>, vector<1x32x32xf32>
    %87 = vector.shape_cast %86 : vector<1x32x32xf32> to vector<32x32xf32>
    %cst_44 = arith.constant dense<0.000000e+00> : vector<8x32xf32>
    %88 = tpu.matmul %85, %87, %cst_44 {dimension_numbers = #tpu.dot_dimension_numbers<[1], [0], [0], [1], [0, 0, 1, 1], [], []>} : vector<8x32xf32>, vector<32x32xf32>, vector<8x32xf32> -> vector<8x32xf32>
    %89 = arith.addf %69, %88 : vector<8x32xf32>
    %c3 = arith.constant 3 : index
    %c0_45 = arith.constant 0 : index
    %c0_46 = arith.constant 0 : index
    %90 = vector.load %arg2[%c3, %c0_45, %c0_46] : memref<4x8x32xf32, #tpu.memory_space<vmem>>, vector<1x8x32xf32>
    %91 = vector.shape_cast %90 : vector<1x8x32xf32> to vector<8x32xf32>
    %cst_47 = arith.constant dense<0.000000e+00> : vector<8x128xf32>
    %92 = tpu.matmul %91, %24, %cst_47 {dimension_numbers = #tpu.dot_dimension_numbers<[1], [1], [0], [0], [0, 0, 1, 0], [], []>} : vector<8x32xf32>, vector<128x32xf32>, vector<8x128xf32> -> vector<8x128xf32>
    %cst_48 = arith.constant 0xFF800000 : f32
    %93 = vector.broadcast %cst_48 : f32 to vector<8x128xf32>
    %94 = arith.select %27, %92, %93 : vector<8x128xi1>, vector<8x128xf32>
    %cst_49 = arith.constant dense<0xFF800000> : vector<8xf32>
    %95 = vector.multi_reduction <maximumf>, %94, %cst_49 [1] : vector<8x128xf32> to vector<8xf32>
    %96 = vector.shape_cast %95 : vector<8xf32> to vector<8x1xf32>
    %97 = vector.broadcast %96 : vector<8x1xf32> to vector<8x128xf32>
    %98 = arith.subf %94, %97 : vector<8x128xf32>
    %99 = math.exp %98 : vector<8x128xf32>
    %cst_50 = arith.constant dense<0.000000e+00> : vector<8xf32>
    %100 = vector.multi_reduction <add>, %99, %cst_50 [1] : vector<8x128xf32> to vector<8xf32>
    %101 = vector.shape_cast %100 : vector<8xf32> to vector<8x1xf32>
    %102 = vector.broadcast %101 : vector<8x1xf32> to vector<8x128xf32>
    %103 = arith.divf %99, %102 : vector<8x128xf32>
    %104 = arith.addf %84, %103 : vector<8x128xf32>
    %cst_51 = arith.constant dense<0.000000e+00> : vector<8x32xf32>
    %105 = tpu.matmul %103, %24, %cst_51 {dimension_numbers = #tpu.dot_dimension_numbers<[1], [0], [0], [1], [0, 0, 1, 1], [], []>} : vector<8x128xf32>, vector<128x32xf32>, vector<8x32xf32> -> vector<8x32xf32>
    %c3_52 = arith.constant 3 : index
    %c0_53 = arith.constant 0 : index
    %c0_54 = arith.constant 0 : index
    %106 = vector.load %arg5[%c3_52, %c0_53, %c0_54] : memref<4x32x32xf32, #tpu.memory_space<vmem>>, vector<1x32x32xf32>
    %107 = vector.shape_cast %106 : vector<1x32x32xf32> to vector<32x32xf32>
    %cst_55 = arith.constant dense<0.000000e+00> : vector<8x32xf32>
    %108 = tpu.matmul %105, %107, %cst_55 {dimension_numbers = #tpu.dot_dimension_numbers<[1], [0], [0], [1], [0, 0, 1, 1], [], []>} : vector<8x32xf32>, vector<32x32xf32>, vector<8x32xf32> -> vector<8x32xf32>
    %109 = arith.addf %89, %108 : vector<8x32xf32>
    %cst_56 = arith.constant 2.500000e-01 : f32
    %110 = vector.broadcast %cst_56 : f32 to vector<8x128xf32>
    %111 = arith.mulf %104, %110 : vector<8x128xf32>
    %c0_57 = arith.constant 0 : index
    %c0_58 = arith.constant 0 : index
    %112 = vector.load %arg6[%c0_57, %c0_58] : memref<1x32xf32, #tpu.memory_space<vmem>>, vector<1x32xf32>
    %113 = vector.broadcast %112 : vector<1x32xf32> to vector<8x32xf32>
    %114 = arith.addf %109, %113 : vector<8x32xf32>
    %c0_59 = arith.constant 0 : index
    %c0_60 = arith.constant 0 : index
    %c0_61 = arith.constant 0 : index
    %115 = vector.load %arg7[%c0_59, %c0_60, %c0_61] : memref<1x8x32xf32, #tpu.memory_space<vmem>>, vector<1x8x32xf32>
    %116 = vector.shape_cast %115 : vector<1x8x32xf32> to vector<8x32xf32>
    %117 = vector.shape_cast %114 : vector<8x32xf32> to vector<1x8x32xf32>
    tpu.vector_store %arg7[%c0_59, %c0_60, %c0_61], %117 {strides = array<i32>} : memref<1x8x32xf32, #tpu.memory_space<vmem>>, vector<1x8x32xf32>,
    %c0_62 = arith.constant 0 : index
    %c0_63 = arith.constant 0 : index
    %c0_64 = arith.constant 0 : index
    %118 = vector.load %arg8[%c0_62, %c0_63, %c0_64] : memref<1x8x128xf32, #tpu.memory_space<vmem>>, vector<1x8x128xf32>
    %119 = vector.shape_cast %118 : vector<1x8x128xf32> to vector<8x128xf32>
    %120 = vector.shape_cast %111 : vector<8x128xf32> to vector<1x8x128xf32>
    tpu.vector_store %arg8[%c0_62, %c0_63, %c0_64], %120 {strides = array<i32>} : memref<1x8x128xf32, #tpu.memory_space<vmem>>, vector<1x8x128xf32>,
    return
  }
  func.func @transform_0(%arg0: i32) -> (i32, i32) {
    %c0_i32 = arith.constant 0 : i32
    %c0_i32_0 = arith.constant 0 : i32
    return %arg0, %c0_i32 : i32, i32
  }
  func.func @transform_1(%arg0: i32) -> (i32, i32, i32) {
    %c0_i32 = arith.constant 0 : i32
    %c0_i32_0 = arith.constant 0 : i32
    %c0_i32_1 = arith.constant 0 : i32
    %c0_i32_2 = arith.constant 0 : i32
    return %c0_i32, %c0_i32_0, %c0_i32_1 : i32, i32, i32
  }
  func.func @transform_2(%arg0: i32) -> (i32, i32) {
    %c0_i32 = arith.constant 0 : i32
    %c0_i32_0 = arith.constant 0 : i32
    %c0_i32_1 = arith.constant 0 : i32
    return %c0_i32, %c0_i32_0 : i32, i32
  }
  func.func @transform_3(%arg0: i32) -> (i32, i32) {
    %c0_i32 = arith.constant 0 : i32
    %c0_i32_0 = arith.constant 0 : i32
    %c0_i32_1 = arith.constant 0 : i32
    return %c0_i32, %c0_i32_0 : i32, i32
  }
  func.func @transform_4(%arg0: i32) -> (i32, i32, i32) {
    %c0_i32 = arith.constant 0 : i32
    %c0_i32_0 = arith.constant 0 : i32
    %c0_i32_1 = arith.constant 0 : i32
    %c0_i32_2 = arith.constant 0 : i32
    return %c0_i32, %c0_i32_0, %c0_i32_1 : i32, i32, i32
  }
  func.func @transform_5(%arg0: i32) -> (i32, i32) {
    %c0_i32 = arith.constant 0 : i32
    %c0_i32_0 = arith.constant 0 : i32
    %c0_i32_1 = arith.constant 0 : i32
    return %c0_i32, %c0_i32_0 : i32, i32
  }
  func.func @transform_6(%arg0: i32) -> (i32, i32, i32) {
    %c0_i32 = arith.constant 0 : i32
    %c0_i32_0 = arith.constant 0 : i32
    %c0_i32_1 = arith.constant 0 : i32
    return %arg0, %c0_i32, %c0_i32_0 : i32, i32, i32
  }
  func.func @transform_7(%arg0: i32) -> (i32, i32, i32) {
    %c0_i32 = arith.constant 0 : i32
    %c0_i32_0 = arith.constant 0 : i32
    %c0_i32_1 = arith.constant 0 : i32
    return %arg0, %c0_i32, %c0_i32_0 : i32, i32, i32
  }
}

</mosaic_0001>

<llo_original>
// kernel: tpu_custom_call.1
$region0: #{tpu_custom_call.1}
  #allocation0 [shape = 'u32[]', space=smem, size = 0x4, offset = 0x4, fixed_abs, tag = 'smem constant byte address 0x4 - core index']
  #allocation1 [shape = 'u32[72,128]{1,0:T(1,128)}', space=vmem, size = 0x9000, scoped, tag = 'internal scratch']
  %s0 = inlined_call_operand.vmem [shape: f32[256,32], index: 0, kind: input, shape index: {}]
  %s1 = inlined_call_operand.vmem [shape: f32[4,8,32], index: 1, kind: input, shape index: {}]
  %s2 = inlined_call_operand.vmem [shape: f32[1,32], index: 2, kind: input, shape index: {}]
  %s3 = inlined_call_operand.vmem [shape: f32[1,32], index: 3, kind: input, shape index: {}]
  %s4 = inlined_call_operand.vmem [shape: f32[4,32,32], index: 4, kind: input, shape index: {}]
  %s5 = inlined_call_operand.vmem [shape: f32[1,32], index: 5, kind: input, shape index: {}]
  %s6 = inlined_call_operand.hbm [shape: f32[2,8,32], index: 6, kind: output, shape index: {0}]
  %s7 = inlined_call_operand.hbm [shape: f32[2,8,128], index: 7, kind: output, shape index: {1}]
  %8 = xla_tuple %s6, %s7
  %s9 = sld [smem:[#allocation0]]
  $region65: #{tpu_custom_call.1} parent=0
    _
  %s11 = ssub.s32 1, %s9
  %s12 = scalar_select 0, %s11, %s9
  $region1: #{tpu_custom_call.1} parent=0
    #allocation2 [shape = 'u8[8192]{0}', space=vmem, size = 0x2000, scoped, tag = 'output window, operand 0']
    #allocation3 [shape = 's32[2]{0}', space=sflag, size = 0x8, scoped, tag = 'scoped memory for tpu_custom_call.1']
    #allocation4 [shape = 'u8[8192]{0}', space=vmem, size = 0x2000, scoped, tag = 'output window, operand 1']
    #allocation5 [shape = 's32[2]{0}', space=sflag, size = 0x8, scoped, tag = 'scoped memory for tpu_custom_call.1']
    %13 = vsyncpa [#allocation3], 0
    %s14 = scalar_lea.sflag [#allocation3], 1
    %15 = vsyncpa %s14, 0
    %16 = vsyncpa [#allocation5], 0
    %s17 = scalar_lea.sflag [#allocation5], 1
    %18 = vsyncpa %s17, 0
    loop: start=0, step=1, limit=4
    $region2: #{tpu_custom_call.1} parent=1 // loop_pre_header
      _
    $region3: #{tpu_custom_call.1} parent=1 // loop_header
      %s20 = sphi 0, %s24
      %p21 = scmp.ge.s32.totalorder %s20, 4
      %s30 = sphi 0, %s32
      %s33 = sphi 0, %s30
      %s34 = sphi 0, %s33
      %s50 = sphi 0, %s34
      %s54 = sphi 0, %s54
      %s56 = sphi 0, %s54
      %s57 = sphi 0, %s56
      %s71 = sphi 0, %s57
      %s75 = sphi 0, %s75
      %s77 = sphi 0, %s75
      %s78 = sphi 0, %s77
      %s92 = sphi 0, %s78
      %s96 = sphi 0, %s96
      %s98 = sphi 0, %s96
      %s99 = sphi 0, %s98
      %s113 = sphi 0, %s99
      %s117 = sphi 0, %s117
      %s119 = sphi 0, %s117
      %s120 = sphi 0, %s119
      %s134 = sphi 0, %s120
      %s138 = sphi 0, %s138
      %s140 = sphi 0, %s138
      %s141 = sphi 0, %s140
      %s155 = sphi 0, %s141
      %s161 = sphi 0, %s163
      %s164 = sphi 0, %s161
      %s165 = sphi 0, %s164
      %s181 = sphi 0, %s165
      %s187 = sphi 0, %s189
      %s190 = sphi 0, %s187
      %s191 = sphi 0, %s190
      %s207 = sphi 0, %s191
    $region4: #{tpu_custom_call.1} parent=1 // loop_header_branch
      %23 = sbr.rel (%p21) target = $region8
    $region5: #{tpu_custom_call.1} parent=1 // loop_body
      %s25 = ssub.s32 %s20, 1
      %s26 = ssub.s32 %s20, 2
      %s27 = sadd.s32 %s20, 1
      %s28 = ssub.s32 %s20, %s27
      %p29 = scmp.eq.s32.totalorder %s28, 0
      %s31 = sadd.s32 %s30, 1
      %s32 = scalar_select %p29, %s30, %s31
      %p35 = pneg %p29
      %p36 = scmp.eq.s32.totalorder %s20, 1
      %p37 = por %p35, %p36
      %p38 = scmp.ne.s32.totalorder %s30, %s33
      %p39 = scmp.eq.s32.totalorder %s20, 0
      %p40 = por %p38, %p39
      %p41 = scmp.ne.s32.totalorder %s30, %s33
      %p42 = scmp.eq.s32.totalorder %s25, 1
      %p43 = por %p41, %p42
      %p44 = scmp.ne.s32.totalorder %s33, %s34
      %p45 = scmp.eq.s32.totalorder %s25, 0
      %p46 = por %p44, %p45
      %p47 = scmp.ne.s32.totalorder %s33, %s34
      %p48 = scmp.eq.s32.totalorder %s26, 1
      %p49 = por %p47, %p48
      %p51 = scmp.ne.s32.totalorder %s34, %s50
      %p52 = scmp.eq.s32.totalorder %s26, 0
      %p53 = por %p51, %p52
      %s55 = sadd.s32 %s54, 1
      %p58 = scmp.eq.s32.totalorder %s20, 1
      %p59 = scmp.ne.s32.totalorder %s54, %s56
      %p60 = scmp.eq.s32.totalorder %s20, 0
      %p61 = por %p59, %p60
      %p62 = scmp.ne.s32.totalorder %s54, %s56
      %p63 = scmp.eq.s32.totalorder %s25, 1
      %p64 = por %p62, %p63
      %p65 = scmp.ne.s32.totalorder %s56, %s57
      %p66 = scmp.eq.s32.totalorder %s25, 0
      %p67 = por %p65, %p66
      %p68 = scmp.ne.s32.totalorder %s56, %s57
      %p69 = scmp.eq.s32.totalorder %s26, 1
      %p70 = por %p68, %p69
      %p72 = scmp.ne.s32.totalorder %s57, %s71
      %p73 = scmp.eq.s32.totalorder %s26, 0
      %p74 = por %p72, %p73
      %s76 = sadd.s32 %s75, 1
      %p79 = scmp.eq.s32.totalorder %s20, 1
      %p80 = scmp.ne.s32.totalorder %s75, %s77
      %p81 = scmp.eq.s32.totalorder %s20, 0
      %p82 = por %p80, %p81
      %p83 = scmp.ne.s32.totalorder %s75, %s77
      %p84 = scmp.eq.s32.totalorder %s25, 1
      %p85 = por %p83, %p84
      %p86 = scmp.ne.s32.totalorder %s77, %s78
      %p87 = scmp.eq.s32.totalorder %s25, 0
      %p88 = por %p86, %p87
      %p89 = scmp.ne.s32.totalorder %s77, %s78
      %p90 = scmp.eq.s32.totalorder %s26, 1
      %p91 = por %p89, %p90
      %p93 = scmp.ne.s32.totalorder %s78, %s92
      %p94 = scmp.eq.s32.totalorder %s26, 0
      %p95 = por %p93, %p94
      %s97 = sadd.s32 %s96, 1
      %p100 = scmp.eq.s32.totalorder %s20, 1
      %p101 = scmp.ne.s32.totalorder %s96, %s98
      %p102 = scmp.eq.s32.totalorder %s20, 0
      %p103 = por %p101, %p102
      %p104 = scmp.ne.s32.totalorder %s96, %s98
      %p105 = scmp.eq.s32.totalorder %s25, 1
      %p106 = por %p104, %p105
      %p107 = scmp.ne.s32.totalorder %s98, %s99
      %p108 = scmp.eq.s32.totalorder %s25, 0
      %p109 = por %p107, %p108
      %p110 = scmp.ne.s32.totalorder %s98, %s99
      %p111 = scmp.eq.s32.totalorder %s26, 1
      %p112 = por %p110, %p111
      %p114 = scmp.ne.s32.totalorder %s99, %s113
      %p115 = scmp.eq.s32.totalorder %s26, 0
      %p116 = por %p114, %p115
      %s118 = sadd.s32 %s117, 1
      %p121 = scmp.eq.s32.totalorder %s20, 1
      %p122 = scmp.ne.s32.totalorder %s117, %s119
      %p123 = scmp.eq.s32.totalorder %s20, 0
      %p124 = por %p122, %p123
      %p125 = scmp.ne.s32.totalorder %s117, %s119
      %p126 = scmp.eq.s32.totalorder %s25, 1
      %p127 = por %p125, %p126
      %p128 = scmp.ne.s32.totalorder %s119, %s120
      %p129 = scmp.eq.s32.totalorder %s25, 0
      %p130 = por %p128, %p129
      %p131 = scmp.ne.s32.totalorder %s119, %s120
      %p132 = scmp.eq.s32.totalorder %s26, 1
      %p133 = por %p131, %p132
      %p135 = scmp.ne.s32.totalorder %s120, %s134
      %p136 = scmp.eq.s32.totalorder %s26, 0
      %p137 = por %p135, %p136
      %s139 = sadd.s32 %s138, 1
      %p142 = scmp.eq.s32.totalorder %s20, 1
      %p143 = scmp.ne.s32.totalorder %s138, %s140
      %p144 = scmp.eq.s32.totalorder %s20, 0
      %p145 = por %p143, %p144
      %p146 = scmp.ne.s32.totalorder %s138, %s140
      %p147 = scmp.eq.s32.totalorder %s25, 1
      %p148 = por %p146, %p147
      %p149 = scmp.ne.s32.totalorder %s140, %s141
      %p150 = scmp.eq.s32.totalorder %s25, 0
      %p151 = por %p149, %p150
      %p152 = scmp.ne.s32.totalorder %s140, %s141
      %p153 = scmp.eq.s32.totalorder %s26, 1
      %p154 = por %p152, %p153
      %p156 = scmp.ne.s32.totalorder %s141, %s155
      %p157 = scmp.eq.s32.totalorder %s26, 0
      %p158 = por %p156, %p157
      %s159 = ssub.s32 %s20, %s27
      %p160 = scmp.eq.s32.totalorder %s159, 0
      %s162 = sadd.s32 %s161, 1
      %s163 = scalar_select %p160, %s161, %s162
      %p166 = pneg %p160
      %p167 = scmp.eq.s32.totalorder %s20, 1
      %p168 = por %p166, %p167
      %p169 = scmp.ne.s32.totalorder %s161, %s164
      %p170 = scmp.eq.s32.totalorder %s20, 0
      %p171 = por %p169, %p170
      %p172 = scmp.ne.s32.totalorder %s161, %s164
      %p173 = scmp.eq.s32.totalorder %s25, 1
      %p174 = por %p172, %p173
      %p175 = scmp.ne.s32.totalorder %s164, %s165
      %p176 = scmp.eq.s32.totalorder %s25, 0
      %p177 = por %p175, %p176
      %p178 = scmp.ne.s32.totalorder %s164, %s165
      %p179 = scmp.eq.s32.totalorder %s26, 1
      %p180 = por %p178, %p179
      %p182 = scmp.ne.s32.totalorder %s165, %s181
      %p183 = scmp.eq.s32.totalorder %s26, 0
      %p184 = por %p182, %p183
      %s185 = ssub.s32 %s20, %s27
      %p186 = scmp.eq.s32.totalorder %s185, 0
      %s188 = sadd.s32 %s187, 1
      %s189 = scalar_select %p186, %s187, %s188
      %p192 = pneg %p186
      %p193 = scmp.eq.s32.totalorder %s20, 1
      %p194 = por %p192, %p193
      %p195 = scmp.ne.s32.totalorder %s187, %s190
      %p196 = scmp.eq.s32.totalorder %s20, 0
      %p197 = por %p195, %p196
      %p198 = scmp.ne.s32.totalorder %s187, %s190
      %p199 = scmp.eq.s32.totalorder %s25, 1
      %p200 = por %p198, %p199
      %p201 = scmp.ne.s32.totalorder %s190, %s191
      %p202 = scmp.eq.s32.totalorder %s25, 0
      %p203 = por %p201, %p202
      %p204 = scmp.ne.s32.totalorder %s190, %s191
      %p205 = scmp.eq.s32.totalorder %s26, 1
      %p206 = por %p204, %p205
      %p208 = scmp.ne.s32.totalorder %s191, %s207
      %p209 = scmp.eq.s32.totalorder %s26, 0
      %p210 = por %p208, %p209
      %p211 = scmp.le.s32.totalorder 1, %s20
      %p212 = scmp.lt.s32.totalorder %s20, 3
      %p213 = pnand %p211, %p212
      %p214 = pneg %p213
      // Predicated region
      $region9: #{tpu_custom_call.1} parent=5 // pred_check
        _
      $region10: #{tpu_custom_call.1} parent=5 // pred_check_branch
        %216 = sbr.rel (%p213) target = $region12
      $region11: #{tpu_custom_call.1} parent=5 // pred_region
        %s217 = ssub.s32 %s20, 1
        // Predicated region
        $region13: #{tpu_custom_call.1} parent=11 // pred_check
          %p218 = pneg %p67
        $region14: #{tpu_custom_call.1} parent=11 // pred_check_branch
          %220 = sbr.rel (%p218) target = $region16
        $region15: #{tpu_custom_call.1} parent=11 // pred_region
          _
        $region16: #{tpu_custom_call.1} parent=11 // pred_fallthru
          _
        // Predicated region
        $region17: #{tpu_custom_call.1} parent=11 // pred_check
          %p221 = pneg %p88
        $region18: #{tpu_custom_call.1} parent=11 // pred_check_branch
          %223 = sbr.rel (%p221) target = $region20
        $region19: #{tpu_custom_call.1} parent=11 // pred_region
          _
        $region20: #{tpu_custom_call.1} parent=11 // pred_fallthru
          _
        // Predicated region
        $region21: #{tpu_custom_call.1} parent=11 // pred_check
          %p224 = pneg %p109
        $region22: #{tpu_custom_call.1} parent=11 // pred_check_branch
          %226 = sbr.rel (%p224) target = $region24
        $region23: #{tpu_custom_call.1} parent=11 // pred_region
          _
        $region24: #{tpu_custom_call.1} parent=11 // pred_fallthru
          _
        // Predicated region
        $region25: #{tpu_custom_call.1} parent=11 // pred_check
          %p227 = pneg %p130
        $region26: #{tpu_custom_call.1} parent=11 // pred_check_branch
          %229 = sbr.rel (%p227) target = $region28
        $region27: #{tpu_custom_call.1} parent=11 // pred_region
          _
        $region28: #{tpu_custom_call.1} parent=11 // pred_fallthru
          _
        // Predicated region
        $region29: #{tpu_custom_call.1} parent=11 // pred_check
          %p230 = pneg %p151
        $region30: #{tpu_custom_call.1} parent=11 // pred_check_branch
          %232 = sbr.rel (%p230) target = $region32
        $region31: #{tpu_custom_call.1} parent=11 // pred_region
          _
        $region32: #{tpu_custom_call.1} parent=11 // pred_fallthru
          _
      $region12: #{tpu_custom_call.1} parent=5 // pred_fallthru
        _
      %p233 = scmp.lt.s32.totalorder %s20, 2
      // Predicated region
      $region33: #{tpu_custom_call.1} parent=5 // pred_check
        %p234 = pneg %p233
      $region34: #{tpu_custom_call.1} parent=5 // pred_check_branch
        %236 = sbr.rel (%p234) target = $region36
      $region35: #{tpu_custom_call.1} parent=5 // pred_region
        // Predicated region
        $region37: #{tpu_custom_call.1} parent=35 // pred_check
          %p237 = pneg %p40
        $region38: #{tpu_custom_call.1} parent=35 // pred_check_branch
          %239 = sbr.rel (%p237) target = $region40
        $region39: #{tpu_custom_call.1} parent=35 // pred_region
          %s240 = smul.u32 16, %s20
          %p241 = scmp.lt.s32.totalorder %s240, 31
          %s242 = scalar_select %p241, %s240, 31
          %s243 = smul.addr %s242, 8
          %s244 = scalar_lea.vmem %s0, %s243
          %s245 = smul.u32 16, %s20
        $region40: #{tpu_custom_call.1} parent=35 // pred_fallthru
          _
      $region36: #{tpu_custom_call.1} parent=5 // pred_fallthru
        _
      %p246 = scmp.le.s32.totalorder 1, %s20
      %p247 = scmp.lt.s32.totalorder %s20, 3
      %p248 = pnand %p246, %p247
      %p249 = pneg %p248
      // Predicated region
      $region41: #{tpu_custom_call.1} parent=5 // pred_check
        _
      $region42: #{tpu_custom_call.1} parent=5 // pred_check_branch
        %251 = sbr.rel (%p248) target = $region44
      $region43: #{tpu_custom_call.1} parent=5 // pred_region
        %s252 = ssub.s32 %s20, 1
        %s253 = smul.u32 16, %s25
        %p254 = scmp.lt.s32.totalorder %s253, 31
        %s255 = scalar_select %p254, %s253, 31
        %s256 = smul.addr %s255, 8
        %s257 = scalar_lea.vmem %s0, %s256
        %p258 = pneg %p46
        %p259 = pneg %p43
        %p260 = pneg %p67
        %p261 = pneg %p64
        %p262 = pneg %p88
        %p263 = pneg %p85
        %p264 = pneg %p109
        %p265 = pneg %p106
        %p266 = pneg %p130
        %p267 = pneg %p127
        %p268 = pneg %p151
        %p269 = pneg %p148
        %p270 = pneg %p177
        %p271 = pneg %p174
        %s272 = sand.u32 %s164, 1
        %s273 = scalar_lea.sflag [#allocation3], %s272
        %s274 = sand.u32 %s164, 1
        %s275 = smul.addr %s274, 8
        %s276 = scalar_lea.vmem [#allocation2], %s275
        %p277 = pneg %p203
        %p278 = pneg %p200
        %s279 = sand.u32 %s190, 1
        %s280 = scalar_lea.sflag [#allocation5], %s279
        %s281 = sand.u32 %s190, 1
        %s282 = smul.addr %s281, 8
        %s283 = scalar_lea.vmem [#allocation4], %s282
        %s284 = smul.u32 16, %s25
        %p285 = scmp.lt.s32.totalorder %s284, 31
        %s286 = scalar_select %p285, %s284, 31
        %s287 = smul.addr %s286, 8
        %s288 = scalar_lea.vmem %s0, %s287
        %s289 = smul.u32 16, %s25
        %v290 = vld [vmem:[%s288] sm:$0xff]
        %v291 = vld [vmem:[%s288 + $0x8] sm:$0xff]
        %v292 = vld [vmem:[%s288 + $0x10] sm:$0xff]
        %v293 = vld [vmem:[%s288 + $0x18] sm:$0xff]
        %v294 = vld [vmem:[%s288 + $0x20] sm:$0xff]
        %v295 = vld [vmem:[%s288 + $0x28] sm:$0xff]
        %v296 = vld [vmem:[%s288 + $0x30] sm:$0xff]
        %v297 = vld [vmem:[%s288 + $0x38] sm:$0xff]
        %v298 = vld [vmem:[%s288 + $0x40] sm:$0xff]
        %v299 = vld [vmem:[%s288 + $0x48] sm:$0xff]
        %v300 = vld [vmem:[%s288 + $0x50] sm:$0xff]
        %v301 = vld [vmem:[%s288 + $0x58] sm:$0xff]
        %v302 = vld [vmem:[%s288 + $0x60] sm:$0xff]
        %v303 = vld [vmem:[%s288 + $0x68] sm:$0xff]
        %v304 = vld [vmem:[%s288 + $0x70] sm:$0xff]
        %v305 = vld [vmem:[%s288 + $0x78] sm:$0xff]
        %vm306 = vcmask 261120
        %v307 = vsel %vm306, %v290, 0.0
        %308 = vadd.xlane.f32.xlu0 %v307
        %v309 = vpop.xlane.xlu0 %308
        %v310 = vsel %vm306, %v291, 0.0
        %311 = vadd.xlane.f32.xlu0 %v310
        %v312 = vpop.xlane.xlu0 %311
        %v313 = vsel %vm306, %v292, 0.0
        %314 = vadd.xlane.f32.xlu0 %v313
        %v315 = vpop.xlane.xlu0 %314
        %v316 = vsel %vm306, %v293, 0.0
        %317 = vadd.xlane.f32.xlu0 %v316
        %v318 = vpop.xlane.xlu0 %317
        %v319 = vsel %vm306, %v294, 0.0
        %320 = vadd.xlane.f32.xlu0 %v319
        %v321 = vpop.xlane.xlu0 %320
        %v322 = vsel %vm306, %v295, 0.0
        %323 = vadd.xlane.f32.xlu0 %v322
        %v324 = vpop.xlane.xlu0 %323
        %v325 = vsel %vm306, %v296, 0.0
        %326 = vadd.xlane.f32.xlu0 %v325
        %v327 = vpop.xlane.xlu0 %326
        %v328 = vsel %vm306, %v297, 0.0
        %329 = vadd.xlane.f32.xlu0 %v328
        %v330 = vpop.xlane.xlu0 %329
        %v331 = vsel %vm306, %v298, 0.0
        %332 = vadd.xlane.f32.xlu0 %v331
        %v333 = vpop.xlane.xlu0 %332
        %v334 = vsel %vm306, %v299, 0.0
        %335 = vadd.xlane.f32.xlu0 %v334
        %v336 = vpop.xlane.xlu0 %335
        %v337 = vsel %vm306, %v300, 0.0
        %338 = vadd.xlane.f32.xlu0 %v337
        %v339 = vpop.xlane.xlu0 %338
        %v340 = vsel %vm306, %v301, 0.0
        %341 = vadd.xlane.f32.xlu0 %v340
        %v342 = vpop.xlane.xlu0 %341
        %v343 = vsel %vm306, %v302, 0.0
        %344 = vadd.xlane.f32.xlu0 %v343
        %v345 = vpop.xlane.xlu0 %344
        %v346 = vsel %vm306, %v303, 0.0
        %347 = vadd.xlane.f32.xlu0 %v346
        %v348 = vpop.xlane.xlu0 %347
        %v349 = vsel %vm306, %v304, 0.0
        %350 = vadd.xlane.f32.xlu0 %v349
        %v351 = vpop.xlane.xlu0 %350
        %v352 = vsel %vm306, %v305, 0.0
        %353 = vadd.xlane.f32.xlu0 %v352
        %v354 = vpop.xlane.xlu0 %353
        %v355 = vrcp.pop 32.0
        %v356 = vmul.f32 32.0, %v355
        %v357 = vsub.f32 1.0, %v356
        %v358 = vmul.f32 %v355, %v357
        %v359 = vadd.f32 %v355, %v358
        %vm360 = vweird.f32 %v355
        %v361 = vsel %vm360, %v355, %v359
        %v362 = vmul.f32 %v309, %v361
        %v363 = vmul.f32 %v312, %v361
        %v364 = vmul.f32 %v315, %v361
        %v365 = vmul.f32 %v318, %v361
        %v366 = vmul.f32 %v321, %v361
        %v367 = vmul.f32 %v324, %v361
        %v368 = vmul.f32 %v327, %v361
        %v369 = vmul.f32 %v330, %v361
        %v370 = vmul.f32 %v333, %v361
        %v371 = vmul.f32 %v336, %v361
        %v372 = vmul.f32 %v339, %v361
        %v373 = vmul.f32 %v342, %v361
        %v374 = vmul.f32 %v345, %v361
        %v375 = vmul.f32 %v348, %v361
        %v376 = vmul.f32 %v351, %v361
        %v377 = vmul.f32 %v354, %v361
        %v378 = vmul.f32 %v290, %v290
        %v379 = vmul.f32 %v291, %v291
        %v380 = vmul.f32 %v292, %v292
        %v381 = vmul.f32 %v293, %v293
        %v382 = vmul.f32 %v294, %v294
        %v383 = vmul.f32 %v295, %v295
        %v384 = vmul.f32 %v296, %v296
        %v385 = vmul.f32 %v297, %v297
        %v386 = vmul.f32 %v298, %v298
        %v387 = vmul.f32 %v299, %v299
        %v388 = vmul.f32 %v300, %v300
        %v389 = vmul.f32 %v301, %v301
        %v390 = vmul.f32 %v302, %v302
        %v391 = vmul.f32 %v303, %v303
        %v392 = vmul.f32 %v304, %v304
        %v393 = vmul.f32 %v305, %v305
        %v394 = vsel %vm306, %v378, 0.0
        %395 = vadd.xlane.f32.xlu0 %v394
        %v396 = vpop.xlane.xlu0 %395
        %v397 = vsel %vm306, %v379, 0.0
        %398 = vadd.xlane.f32.xlu0 %v397
        %v399 = vpop.xlane.xlu0 %398
        %v400 = vsel %vm306, %v380, 0.0
        %401 = vadd.xlane.f32.xlu0 %v400
        %v402 = vpop.xlane.xlu0 %401
        %v403 = vsel %vm306, %v381, 0.0
        %404 = vadd.xlane.f32.xlu0 %v403
        %v405 = vpop.xlane.xlu0 %404
        %v406 = vsel %vm306, %v382, 0.0
        %407 = vadd.xlane.f32.xlu0 %v406
        %v408 = vpop.xlane.xlu0 %407
        %v409 = vsel %vm306, %v383, 0.0
        %410 = vadd.xlane.f32.xlu0 %v409
        %v411 = vpop.xlane.xlu0 %410
        %v412 = vsel %vm306, %v384, 0.0
        %413 = vadd.xlane.f32.xlu0 %v412
        %v414 = vpop.xlane.xlu0 %413
        %v415 = vsel %vm306, %v385, 0.0
        %416 = vadd.xlane.f32.xlu0 %v415
        %v417 = vpop.xlane.xlu0 %416
        %v418 = vsel %vm306, %v386, 0.0
        %419 = vadd.xlane.f32.xlu0 %v418
        %v420 = vpop.xlane.xlu0 %419
        %v421 = vsel %vm306, %v387, 0.0
        %422 = vadd.xlane.f32.xlu0 %v421
        %v423 = vpop.xlane.xlu0 %422
        %v424 = vsel %vm306, %v388, 0.0
        %425 = vadd.xlane.f32.xlu0 %v424
        %v426 = vpop.xlane.xlu0 %425
        %v427 = vsel %vm306, %v389, 0.0
        %428 = vadd.xlane.f32.xlu0 %v427
        %v429 = vpop.xlane.xlu0 %428
        %v430 = vsel %vm306, %v390, 0.0
        %431 = vadd.xlane.f32.xlu0 %v430
        %v432 = vpop.xlane.xlu0 %431
        %v433 = vsel %vm306, %v391, 0.0
        %434 = vadd.xlane.f32.xlu0 %v433
        %v435 = vpop.xlane.xlu0 %434
        %v436 = vsel %vm306, %v392, 0.0
        %437 = vadd.xlane.f32.xlu0 %v436
        %v438 = vpop.xlane.xlu0 %437
        %v439 = vsel %vm306, %v393, 0.0
        %440 = vadd.xlane.f32.xlu0 %v439
        %v441 = vpop.xlane.xlu0 %440
        %v442 = vmul.f32 %v396, %v361
        %v443 = vmul.f32 %v399, %v361
        %v444 = vmul.f32 %v402, %v361
        %v445 = vmul.f32 %v405, %v361
        %v446 = vmul.f32 %v408, %v361
        %v447 = vmul.f32 %v411, %v361
        %v448 = vmul.f32 %v414, %v361
        %v449 = vmul.f32 %v417, %v361
        %v450 = vmul.f32 %v420, %v361
        %v451 = vmul.f32 %v423, %v361
        %v452 = vmul.f32 %v426, %v361
        %v453 = vmul.f32 %v429, %v361
        %v454 = vmul.f32 %v432, %v361
        %v455 = vmul.f32 %v435, %v361
        %v456 = vmul.f32 %v438, %v361
        %v457 = vmul.f32 %v441, %v361
        %v458 = vmul.f32 %v362, %v362
        %v459 = vmul.f32 %v363, %v363
        %v460 = vmul.f32 %v364, %v364
        %v461 = vmul.f32 %v365, %v365
        %v462 = vmul.f32 %v366, %v366
        %v463 = vmul.f32 %v367, %v367
        %v464 = vmul.f32 %v368, %v368
        %v465 = vmul.f32 %v369, %v369
        %v466 = vmul.f32 %v370, %v370
        %v467 = vmul.f32 %v371, %v371
        %v468 = vmul.f32 %v372, %v372
        %v469 = vmul.f32 %v373, %v373
        %v470 = vmul.f32 %v374, %v374
        %v471 = vmul.f32 %v375, %v375
        %v472 = vmul.f32 %v376, %v376
        %v473 = vmul.f32 %v377, %v377
        %v474 = vsub.f32 %v442, %v458
        %v475 = vsub.f32 %v443, %v459
        %v476 = vsub.f32 %v444, %v460
        %v477 = vsub.f32 %v445, %v461
        %v478 = vsub.f32 %v446, %v462
        %v479 = vsub.f32 %v447, %v463
        %v480 = vsub.f32 %v448, %v464
        %v481 = vsub.f32 %v449, %v465
        %v482 = vsub.f32 %v450, %v466
        %v483 = vsub.f32 %v451, %v467
        %v484 = vsub.f32 %v452, %v468
        %v485 = vsub.f32 %v453, %v469
        %v486 = vsub.f32 %v454, %v470
        %v487 = vsub.f32 %v455, %v471
        %v488 = vsub.f32 %v456, %v472
        %v489 = vsub.f32 %v457, %v473
        %v490 = vsub.f32 %v290, %v362
        %v491 = vsub.f32 %v291, %v363
        %v492 = vsub.f32 %v292, %v364
        %v493 = vsub.f32 %v293, %v365
        %v494 = vsub.f32 %v294, %v366
        %v495 = vsub.f32 %v295, %v367
        %v496 = vsub.f32 %v296, %v368
        %v497 = vsub.f32 %v297, %v369
        %v498 = vsub.f32 %v298, %v370
        %v499 = vsub.f32 %v299, %v371
        %v500 = vsub.f32 %v300, %v372
        %v501 = vsub.f32 %v301, %v373
        %v502 = vsub.f32 %v302, %v374
        %v503 = vsub.f32 %v303, %v375
        %v504 = vsub.f32 %v304, %v376
        %v505 = vsub.f32 %v305, %v377
        %v506 = vadd.f32 %v474, 1e-05
        %v507 = vadd.f32 %v475, 1e-05
        %v508 = vadd.f32 %v476, 1e-05
        %v509 = vadd.f32 %v477, 1e-05
        %v510 = vadd.f32 %v478, 1e-05
        %v511 = vadd.f32 %v479, 1e-05
        %v512 = vadd.f32 %v480, 1e-05
        %v513 = vadd.f32 %v481, 1e-05
        %v514 = vadd.f32 %v482, 1e-05
        %v515 = vadd.f32 %v483, 1e-05
        %v516 = vadd.f32 %v484, 1e-05
        %v517 = vadd.f32 %v485, 1e-05
        %v518 = vadd.f32 %v486, 1e-05
        %v519 = vadd.f32 %v487, 1e-05
        %v520 = vadd.f32 %v488, 1e-05
        %v521 = vadd.f32 %v489, 1e-05
        %v522 = vrsqrt.pop %v506
        %v523 = vmul.f32 %v522, %v506
        %v524 = vmul.f32 %v523, %v522
        %v525 = vmul.f32 0.5, %v524
        %v526 = vsub.f32 1.5, %v525
        %v527 = vmul.f32 %v522, %v526
        %vm528 = vweird.f32 %v506
        %vm529 = vweird.f32 %v522
        %vm530 = vmor %vm528, %vm529
        %v531 = vsel %vm530, %v522, %v527
        %v532 = vrsqrt.pop %v507
        %v533 = vmul.f32 %v532, %v507
        %v534 = vmul.f32 %v533, %v532
        %v535 = vmul.f32 0.5, %v534
        %v536 = vsub.f32 1.5, %v535
        %v537 = vmul.f32 %v532, %v536
        %vm538 = vweird.f32 %v507
        %vm539 = vweird.f32 %v532
        %vm540 = vmor %vm538, %vm539
        %v541 = vsel %vm540, %v532, %v537
        %v542 = vrsqrt.pop %v508
        %v543 = vmul.f32 %v542, %v508
        %v544 = vmul.f32 %v543, %v542
        %v545 = vmul.f32 0.5, %v544
        %v546 = vsub.f32 1.5, %v545
        %v547 = vmul.f32 %v542, %v546
        %vm548 = vweird.f32 %v508
        %vm549 = vweird.f32 %v542
        %vm550 = vmor %vm548, %vm549
        %v551 = vsel %vm550, %v542, %v547
        %v552 = vrsqrt.pop %v509
        %v553 = vmul.f32 %v552, %v509
        %v554 = vmul.f32 %v553, %v552
        %v555 = vmul.f32 0.5, %v554
        %v556 = vsub.f32 1.5, %v555
        %v557 = vmul.f32 %v552, %v556
        %vm558 = vweird.f32 %v509
        %vm559 = vweird.f32 %v552
        %vm560 = vmor %vm558, %vm559
        %v561 = vsel %vm560, %v552, %v557
        %v562 = vrsqrt.pop %v510
        %v563 = vmul.f32 %v562, %v510
        %v564 = vmul.f32 %v563, %v562
        %v565 = vmul.f32 0.5, %v564
        %v566 = vsub.f32 1.5, %v565
        %v567 = vmul.f32 %v562, %v566
        %vm568 = vweird.f32 %v510
        %vm569 = vweird.f32 %v562
        %vm570 = vmor %vm568, %vm569
        %v571 = vsel %vm570, %v562, %v567
        %v572 = vrsqrt.pop %v511
        %v573 = vmul.f32 %v572, %v511
        %v574 = vmul.f32 %v573, %v572
        %v575 = vmul.f32 0.5, %v574
        %v576 = vsub.f32 1.5, %v575
        %v577 = vmul.f32 %v572, %v576
        %vm578 = vweird.f32 %v511
        %vm579 = vweird.f32 %v572
        %vm580 = vmor %vm578, %vm579
        %v581 = vsel %vm580, %v572, %v577
        %v582 = vrsqrt.pop %v512
        %v583 = vmul.f32 %v582, %v512
        %v584 = vmul.f32 %v583, %v582
        %v585 = vmul.f32 0.5, %v584
        %v586 = vsub.f32 1.5, %v585
        %v587 = vmul.f32 %v582, %v586
        %vm588 = vweird.f32 %v512
        %vm589 = vweird.f32 %v582
        %vm590 = vmor %vm588, %vm589
        %v591 = vsel %vm590, %v582, %v587
        %v592 = vrsqrt.pop %v513
        %v593 = vmul.f32 %v592, %v513
        %v594 = vmul.f32 %v593, %v592
        %v595 = vmul.f32 0.5, %v594
        %v596 = vsub.f32 1.5, %v595
        %v597 = vmul.f32 %v592, %v596
        %vm598 = vweird.f32 %v513
        %vm599 = vweird.f32 %v592
        %vm600 = vmor %vm598, %vm599
        %v601 = vsel %vm600, %v592, %v597
        %v602 = vrsqrt.pop %v514
        %v603 = vmul.f32 %v602, %v514
        %v604 = vmul.f32 %v603, %v602
        %v605 = vmul.f32 0.5, %v604
        %v606 = vsub.f32 1.5, %v605
        %v607 = vmul.f32 %v602, %v606
        %vm608 = vweird.f32 %v514
        %vm609 = vweird.f32 %v602
        %vm610 = vmor %vm608, %vm609
        %v611 = vsel %vm610, %v602, %v607
        %v612 = vrsqrt.pop %v515
        %v613 = vmul.f32 %v612, %v515
        %v614 = vmul.f32 %v613, %v612
        %v615 = vmul.f32 0.5, %v614
        %v616 = vsub.f32 1.5, %v615
        %v617 = vmul.f32 %v612, %v616
        %vm618 = vweird.f32 %v515
        %vm619 = vweird.f32 %v612
        %vm620 = vmor %vm618, %vm619
        %v621 = vsel %vm620, %v612, %v617
        %v622 = vrsqrt.pop %v516
        %v623 = vmul.f32 %v622, %v516
        %v624 = vmul.f32 %v623, %v622
        %v625 = vmul.f32 0.5, %v624
        %v626 = vsub.f32 1.5, %v625
        %v627 = vmul.f32 %v622, %v626
        %vm628 = vweird.f32 %v516
        %vm629 = vweird.f32 %v622
        %vm630 = vmor %vm628, %vm629
        %v631 = vsel %vm630, %v622, %v627
        %v632 = vrsqrt.pop %v517
        %v633 = vmul.f32 %v632, %v517
        %v634 = vmul.f32 %v633, %v632
        %v635 = vmul.f32 0.5, %v634
        %v636 = vsub.f32 1.5, %v635
        %v637 = vmul.f32 %v632, %v636
        %vm638 = vweird.f32 %v517
        %vm639 = vweird.f32 %v632
        %vm640 = vmor %vm638, %vm639
        %v641 = vsel %vm640, %v632, %v637
        %v642 = vrsqrt.pop %v518
        %v643 = vmul.f32 %v642, %v518
        %v644 = vmul.f32 %v643, %v642
        %v645 = vmul.f32 0.5, %v644
        %v646 = vsub.f32 1.5, %v645
        %v647 = vmul.f32 %v642, %v646
        %vm648 = vweird.f32 %v518
        %vm649 = vweird.f32 %v642
        %vm650 = vmor %vm648, %vm649
        %v651 = vsel %vm650, %v642, %v647
        %v652 = vrsqrt.pop %v519
        %v653 = vmul.f32 %v652, %v519
        %v654 = vmul.f32 %v653, %v652
        %v655 = vmul.f32 0.5, %v654
        %v656 = vsub.f32 1.5, %v655
        %v657 = vmul.f32 %v652, %v656
        %vm658 = vweird.f32 %v519
        %vm659 = vweird.f32 %v652
        %vm660 = vmor %vm658, %vm659
        %v661 = vsel %vm660, %v652, %v657
        %v662 = vrsqrt.pop %v520
        %v663 = vmul.f32 %v662, %v520
        %v664 = vmul.f32 %v663, %v662
        %v665 = vmul.f32 0.5, %v664
        %v666 = vsub.f32 1.5, %v665
        %v667 = vmul.f32 %v662, %v666
        %vm668 = vweird.f32 %v520
        %vm669 = vweird.f32 %v662
        %vm670 = vmor %vm668, %vm669
        %v671 = vsel %vm670, %v662, %v667
        %v672 = vrsqrt.pop %v521
        %v673 = vmul.f32 %v672, %v521
        %v674 = vmul.f32 %v673, %v672
        %v675 = vmul.f32 0.5, %v674
        %v676 = vsub.f32 1.5, %v675
        %v677 = vmul.f32 %v672, %v676
        %vm678 = vweird.f32 %v521
        %vm679 = vweird.f32 %v672
        %vm680 = vmor %vm678, %vm679
        %v681 = vsel %vm680, %v672, %v677
        %v682 = vmul.f32 %v490, %v531
        %v683 = vmul.f32 %v491, %v541
        %v684 = vmul.f32 %v492, %v551
        %v685 = vmul.f32 %v493, %v561
        %v686 = vmul.f32 %v494, %v571
        %v687 = vmul.f32 %v495, %v581
        %v688 = vmul.f32 %v496, %v591
        %v689 = vmul.f32 %v497, %v601
        %v690 = vmul.f32 %v498, %v611
        %v691 = vmul.f32 %v499, %v621
        %v692 = vmul.f32 %v500, %v631
        %v693 = vmul.f32 %v501, %v641
        %v694 = vmul.f32 %v502, %v651
        %v695 = vmul.f32 %v503, %v661
        %v696 = vmul.f32 %v504, %v671
        %v697 = vmul.f32 %v505, %v681
        %v698 = vld [vmem:[%s2] sm:$0x1]
        %v700 = vperm.slane %v698, 0
        %v702 = vmul.f32 %v682, %v700
        %v703 = vmul.f32 %v683, %v700
        %v704 = vmul.f32 %v684, %v700
        %v705 = vmul.f32 %v685, %v700
        %v706 = vmul.f32 %v686, %v700
        %v707 = vmul.f32 %v687, %v700
        %v708 = vmul.f32 %v688, %v700
        %v709 = vmul.f32 %v689, %v700
        %v710 = vmul.f32 %v690, %v700
        %v711 = vmul.f32 %v691, %v700
        %v712 = vmul.f32 %v692, %v700
        %v713 = vmul.f32 %v693, %v700
        %v714 = vmul.f32 %v694, %v700
        %v715 = vmul.f32 %v695, %v700
        %v716 = vmul.f32 %v696, %v700
        %v717 = vmul.f32 %v697, %v700
        %v718 = vld [vmem:[%s3] sm:$0x1]
        %v720 = vperm.slane %v718, 0
        %v722 = vadd.f32 %v702, %v720
        %v723 = vadd.f32 %v703, %v720
        %v724 = vadd.f32 %v704, %v720
        %v725 = vadd.f32 %v705, %v720
        %v726 = vadd.f32 %v706, %v720
        %v727 = vadd.f32 %v707, %v720
        %v728 = vadd.f32 %v708, %v720
        %v729 = vadd.f32 %v709, %v720
        %v730 = vadd.f32 %v710, %v720
        %v731 = vadd.f32 %v711, %v720
        %v732 = vadd.f32 %v712, %v720
        %v733 = vadd.f32 %v713, %v720
        %v734 = vadd.f32 %v714, %v720
        %v735 = vadd.f32 %v715, %v720
        %v736 = vadd.f32 %v716, %v720
        %v737 = vadd.f32 %v717, %v720
        %v738 = vlaneseq
        %v739 = vand.u32 %v738, 127
        %vm740 = vcmp.lt.s32.totalorder %v739, 16
        %v741 = vld [vmem:[%s1] sm:$0xff]
        %v743 = vsel %vm306, %v741, 0
        %v746 = vsel %vm306, %v722, 0
        %v749 = vsel %vm306, %v723, 0
        %v752 = vsel %vm306, %v724, 0
        %v755 = vsel %vm306, %v725, 0
        %v758 = vsel %vm306, %v726, 0
        %v761 = vsel %vm306, %v727, 0
        %v764 = vsel %vm306, %v728, 0
        %v767 = vsel %vm306, %v729, 0
        %v770 = vsel %vm306, %v730, 0
        %v773 = vsel %vm306, %v731, 0
        %v776 = vsel %vm306, %v732, 0
        %v779 = vsel %vm306, %v733, 0
        %v782 = vsel %vm306, %v734, 0
        %v785 = vsel %vm306, %v735, 0
        %v788 = vsel %vm306, %v736, 0
        %v791 = vsel %vm306, %v737, 0
        %793 = vmatpush.xpose.msra.mxu0 %v791
        %794 = vmatpush.xpose.msra.mxu0 %v788
        %795 = vmatpush.xpose.msra.mxu0 %v785
        %796 = vmatpush.xpose.msra.mxu0 %v782
        %797 = vmatpush.xpose.msra.mxu0 %v779
        %798 = vmatpush.xpose.msra.mxu0 %v776
        %799 = vmatpush.xpose.msra.mxu0 %v773
        %800 = vmatpush.xpose.msra.mxu0 %v770
        %801 = vmatpush.xpose.msra.mxu0 %v767
        %802 = vmatpush.xpose.msra.mxu0 %v764
        %803 = vmatpush.xpose.msra.mxu0 %v761
        %804 = vmatpush.xpose.msra.mxu0 %v758
        %805 = vmatpush.xpose.msra.mxu0 %v755
        %806 = vmatpush.xpose.msra.mxu0 %v752
        %807 = vmatpush.xpose.msra.mxu0 %v749
        %808 = vmatpush.xpose.msra.mxu0 %v746
        %809 = vmatmul.f32.gmra.mxu0 %v743
        %v810 = vpop.f32.mrf.mxu0
        %v811 = vadd.f32 0.0, %v810
        %812 = vdwg.mxu0
        %v813 = vsel %vm740, %v811, -inf
        %814 = vmax.xlane.f32.xlu0 %v813
        %v815 = vpop.xlane.xlu0 %814
        %v816 = vsub.f32 %v813, %v815
        %v817 = vmul.f32 %v816, 1.442695
        %v818 = vpow.pop %v817
        %819 = vadd.xlane.f32.xlu0 %v818
        %v820 = vpop.xlane.xlu0 %819
        %v821 = vrcp.pop %v820
        %v822 = vmul.f32 %v820, %v821
        %v823 = vsub.f32 1.0, %v822
        %v824 = vmul.f32 %v821, %v823
        %v825 = vadd.f32 %v821, %v824
        %vm826 = vweird.f32 %v820
        %vm827 = vweird.f32 %v821
        %vm828 = vmor %vm826, %vm827
        %v829 = vsel %vm828, %v821, %v825
        %v830 = vand.u32 2147483647, %v820
        %vm831 = vcmp.eq.f32.partialorder %v830, 8.507059e+37
        %v832 = vand.u32 %v820, 2147483648
        %v833 = vor.u32 1.1754944e-38, %v832
        %v834 = vsel %vm831, %v833, %v829
        %v835 = vmul.f32 %v818, %v834
        %v836 = vadd.f32 %v835, 0.0
        %837 = vmatpush.msra.mxu0 %v737
        %838 = vmatpush.msra.mxu0 %v736
        %839 = vmatpush.msra.mxu0 %v735
        %840 = vmatpush.msra.mxu0 %v734
        %841 = vmatpush.msra.mxu0 %v733
        %842 = vmatpush.msra.mxu0 %v732
        %843 = vmatpush.msra.mxu0 %v731
        %844 = vmatpush.msra.mxu0 %v730
        %845 = vmatpush.msra.mxu0 %v729
        %846 = vmatpush.msra.mxu0 %v728
        %847 = vmatpush.msra.mxu0 %v727
        %848 = vmatpush.msra.mxu0 %v726
        %849 = vmatpush.msra.mxu0 %v725
        %850 = vmatpush.msra.mxu0 %v724
        %851 = vmatpush.msra.mxu0 %v723
        %852 = vmatpush.msra.mxu0 %v722
        %853 = vmatmul.f32.gmra.mxu0 %v835
        %v854 = vpop.f32.mrf.mxu0
        %v855 = vadd.f32 0.0, %v854
        %856 = vdwg.mxu0
        %v857 = vld [vmem:[%s4] sm:$0xff]
        %v858 = vld [vmem:[%s4 + $0x8] sm:$0xff]
        %v859 = vld [vmem:[%s4 + $0x10] sm:$0xff]
        %v860 = vld [vmem:[%s4 + $0x18] sm:$0xff]
        %s861 = scalar_lea.vmem %s1, 8
        %v862 = vld [vmem:[%s861] sm:$0xff]
        %v864 = vsel %vm306, %v862, 0
        %866 = vmatpush.xpose.msra.mxu0 %v791
        %867 = vmatpush.xpose.msra.mxu0 %v788
        %868 = vmatpush.xpose.msra.mxu0 %v785
        %869 = vmatpush.xpose.msra.mxu0 %v782
        %870 = vmatpush.xpose.msra.mxu0 %v779
        %871 = vmatpush.xpose.msra.mxu0 %v776
        %872 = vmatpush.xpose.msra.mxu0 %v773
        %873 = vmatpush.xpose.msra.mxu0 %v770
        %874 = vmatpush.xpose.msra.mxu0 %v767
        %875 = vmatpush.xpose.msra.mxu0 %v764
        %876 = vmatpush.xpose.msra.mxu0 %v761
        %877 = vmatpush.xpose.msra.mxu0 %v758
        %878 = vmatpush.xpose.msra.mxu0 %v755
        %879 = vmatpush.xpose.msra.mxu0 %v752
        %880 = vmatpush.xpose.msra.mxu0 %v749
        %881 = vmatpush.xpose.msra.mxu0 %v746
        %882 = vmatmul.f32.gmra.mxu0 %v864
        %v883 = vpop.f32.mrf.mxu0
        %v884 = vadd.f32 0.0, %v883
        %885 = vdwg.mxu0
        %v886 = vsel %vm740, %v884, -inf
        %887 = vmax.xlane.f32.xlu0 %v886
        %v888 = vpop.xlane.xlu0 %887
        %v889 = vsub.f32 %v886, %v888
        %v890 = vmul.f32 %v889, 1.442695
        %v891 = vpow.pop %v890
        %892 = vadd.xlane.f32.xlu0 %v891
        %v893 = vpop.xlane.xlu0 %892
        %v894 = vrcp.pop %v893
        %v895 = vmul.f32 %v893, %v894
        %v896 = vsub.f32 1.0, %v895
        %v897 = vmul.f32 %v894, %v896
        %v898 = vadd.f32 %v894, %v897
        %vm899 = vweird.f32 %v893
        %vm900 = vweird.f32 %v894
        %vm901 = vmor %vm899, %vm900
        %v902 = vsel %vm901, %v894, %v898
        %v903 = vand.u32 2147483647, %v893
        %vm904 = vcmp.eq.f32.partialorder %v903, 8.507059e+37
        %v905 = vand.u32 %v893, 2147483648
        %v906 = vor.u32 1.1754944e-38, %v905
        %v907 = vsel %vm904, %v906, %v902
        %v908 = vmul.f32 %v891, %v907
        %v909 = vadd.f32 %v836, %v908
        %910 = vmatpush.msra.mxu0 %v737
        %911 = vmatpush.msra.mxu0 %v736
        %912 = vmatpush.msra.mxu0 %v735
        %913 = vmatpush.msra.mxu0 %v734
        %914 = vmatpush.msra.mxu0 %v733
        %915 = vmatpush.msra.mxu0 %v732
        %916 = vmatpush.msra.mxu0 %v731
        %917 = vmatpush.msra.mxu0 %v730
        %918 = vmatpush.msra.mxu0 %v729
        %919 = vmatpush.msra.mxu0 %v728
        %920 = vmatpush.msra.mxu0 %v727
        %921 = vmatpush.msra.mxu0 %v726
        %922 = vmatpush.msra.mxu0 %v725
        %923 = vmatpush.msra.mxu0 %v724
        %924 = vmatpush.msra.mxu0 %v723
        %925 = vmatpush.msra.mxu0 %v722
        %926 = vmatmul.f32.gmra.mxu0 %v908
        %v927 = vpop.f32.mrf.mxu0
        %v928 = vadd.f32 0.0, %v927
        %929 = vdwg.mxu0
        %s930 = scalar_lea.vmem %s4, 32
        %v931 = vld [vmem:[%s930] sm:$0xff]
        %v932 = vld [vmem:[%s930 + $0x8] sm:$0xff]
        %v933 = vld [vmem:[%s930 + $0x10] sm:$0xff]
        %v934 = vld [vmem:[%s930 + $0x18] sm:$0xff]
        %v936 = vsel %vm306, %v928, 0
        %938 = vmatpush.msra.mxu0 0.0
        %939 = vmatpush.msra.mxu0 0.0
        %940 = vmatpush.msra.mxu0 0.0
        %941 = vmatpush.msra.mxu0 0.0
        %942 = vmatpush.msra.mxu0 0.0
        %943 = vmatpush.msra.mxu0 0.0
        %944 = vmatpush.msra.mxu0 0.0
        %945 = vmatpush.msra.mxu0 0.0
        %946 = vmatpush.msra.mxu0 0.0
        %947 = vmatpush.msra.mxu0 0.0
        %948 = vmatpush.msra.mxu0 0.0
        %949 = vmatpush.msra.mxu0 0.0
        %950 = vmatpush.msra.mxu0 %v934
        %951 = vmatpush.msra.mxu0 %v933
        %952 = vmatpush.msra.mxu0 %v932
        %953 = vmatpush.msra.mxu0 %v931
        %954 = vmatmul.f32.gmra.mxu0 %v936
        %v955 = vpop.f32.mrf.mxu0
        %v956 = vadd.f32 0.0, %v955
        %957 = vdwg.mxu0
        %v959 = vsel %vm306, %v855, 0
        %961 = vmatpush.msra.mxu0 0.0
        %962 = vmatpush.msra.mxu0 0.0
        %963 = vmatpush.msra.mxu0 0.0
        %964 = vmatpush.msra.mxu0 0.0
        %965 = vmatpush.msra.mxu0 0.0
        %966 = vmatpush.msra.mxu0 0.0
        %967 = vmatpush.msra.mxu0 0.0
        %968 = vmatpush.msra.mxu0 0.0
        %969 = vmatpush.msra.mxu0 0.0
        %970 = vmatpush.msra.mxu0 0.0
        %971 = vmatpush.msra.mxu0 0.0
        %972 = vmatpush.msra.mxu0 0.0
        %973 = vmatpush.msra.mxu0 %v860
        %974 = vmatpush.msra.mxu0 %v859
        %975 = vmatpush.msra.mxu0 %v858
        %976 = vmatpush.msra.mxu0 %v857
        %977 = vmatmul.f32.gmra.mxu0 %v959
        %v978 = vpop.f32.mrf.mxu0
        %v979 = vadd.f32 %v956, %v978
        %980 = vdwg.mxu0
        %s981 = scalar_lea.vmem %s1, 16
        %v982 = vld [vmem:[%s981] sm:$0xff]
        %v984 = vsel %vm306, %v982, 0
        %986 = vmatpush.xpose.msra.mxu0 %v791
        %987 = vmatpush.xpose.msra.mxu0 %v788
        %988 = vmatpush.xpose.msra.mxu0 %v785
        %989 = vmatpush.xpose.msra.mxu0 %v782
        %990 = vmatpush.xpose.msra.mxu0 %v779
        %991 = vmatpush.xpose.msra.mxu0 %v776
        %992 = vmatpush.xpose.msra.mxu0 %v773
        %993 = vmatpush.xpose.msra.mxu0 %v770
        %994 = vmatpush.xpose.msra.mxu0 %v767
        %995 = vmatpush.xpose.msra.mxu0 %v764
        %996 = vmatpush.xpose.msra.mxu0 %v761
        %997 = vmatpush.xpose.msra.mxu0 %v758
        %998 = vmatpush.xpose.msra.mxu0 %v755
        %999 = vmatpush.xpose.msra.mxu0 %v752
        %1000 = vmatpush.xpose.msra.mxu0 %v749
        %1001 = vmatpush.xpose.msra.mxu0 %v746
        %1002 = vmatmul.f32.gmra.mxu0 %v984
        %v1003 = vpop.f32.mrf.mxu0
        %v1004 = vadd.f32 0.0, %v1003
        %1005 = vdwg.mxu0
        %v1006 = vsel %vm740, %v1004, -inf
        %1007 = vmax.xlane.f32.xlu0 %v1006
        %v1008 = vpop.xlane.xlu0 %1007
        %v1009 = vsub.f32 %v1006, %v1008
        %v1010 = vmul.f32 %v1009, 1.442695
        %v1011 = vpow.pop %v1010
        %1012 = vadd.xlane.f32.xlu0 %v1011
        %v1013 = vpop.xlane.xlu0 %1012
        %v1014 = vrcp.pop %v1013
        %v1015 = vmul.f32 %v1013, %v1014
        %v1016 = vsub.f32 1.0, %v1015
        %v1017 = vmul.f32 %v1014, %v1016
        %v1018 = vadd.f32 %v1014, %v1017
        %vm1019 = vweird.f32 %v1013
        %vm1020 = vweird.f32 %v1014
        %vm1021 = vmor %vm1019, %vm1020
        %v1022 = vsel %vm1021, %v1014, %v1018
        %v1023 = vand.u32 2147483647, %v1013
        %vm1024 = vcmp.eq.f32.partialorder %v1023, 8.507059e+37
        %v1025 = vand.u32 %v1013, 2147483648
        %v1026 = vor.u32 1.1754944e-38, %v1025
        %v1027 = vsel %vm1024, %v1026, %v1022
        %v1028 = vmul.f32 %v1011, %v1027
        %v1029 = vadd.f32 %v909, %v1028
        %1030 = vmatpush.msra.mxu0 %v737
        %1031 = vmatpush.msra.mxu0 %v736
        %1032 = vmatpush.msra.mxu0 %v735
        %1033 = vmatpush.msra.mxu0 %v734
        %1034 = vmatpush.msra.mxu0 %v733
        %1035 = vmatpush.msra.mxu0 %v732
        %1036 = vmatpush.msra.mxu0 %v731
        %1037 = vmatpush.msra.mxu0 %v730
        %1038 = vmatpush.msra.mxu0 %v729
        %1039 = vmatpush.msra.mxu0 %v728
        %1040 = vmatpush.msra.mxu0 %v727
        %1041 = vmatpush.msra.mxu0 %v726
        %1042 = vmatpush.msra.mxu0 %v725
        %1043 = vmatpush.msra.mxu0 %v724
        %1044 = vmatpush.msra.mxu0 %v723
        %1045 = vmatpush.msra.mxu0 %v722
        %1046 = vmatmul.f32.gmra.mxu0 %v1028
        %v1047 = vpop.f32.mrf.mxu0
        %v1048 = vadd.f32 0.0, %v1047
        %1049 = vdwg.mxu0
        %s1050 = scalar_lea.vmem %s4, 64
        %v1051 = vld [vmem:[%s1050] sm:$0xff]
        %v1052 = vld [vmem:[%s1050 + $0x8] sm:$0xff]
        %v1053 = vld [vmem:[%s1050 + $0x10] sm:$0xff]
        %v1054 = vld [vmem:[%s1050 + $0x18] sm:$0xff]
        %v1056 = vsel %vm306, %v1048, 0
        %1058 = vmatpush.msra.mxu0 0.0
        %1059 = vmatpush.msra.mxu0 0.0
        %1060 = vmatpush.msra.mxu0 0.0
        %1061 = vmatpush.msra.mxu0 0.0
        %1062 = vmatpush.msra.mxu0 0.0
        %1063 = vmatpush.msra.mxu0 0.0
        %1064 = vmatpush.msra.mxu0 0.0
        %1065 = vmatpush.msra.mxu0 0.0
        %1066 = vmatpush.msra.mxu0 0.0
        %1067 = vmatpush.msra.mxu0 0.0
        %1068 = vmatpush.msra.mxu0 0.0
        %1069 = vmatpush.msra.mxu0 0.0
        %1070 = vmatpush.msra.mxu0 %v1054
        %1071 = vmatpush.msra.mxu0 %v1053
        %1072 = vmatpush.msra.mxu0 %v1052
        %1073 = vmatpush.msra.mxu0 %v1051
        %1074 = vmatmul.f32.gmra.mxu0 %v1056
        %v1075 = vpop.f32.mrf.mxu0
        %v1076 = vadd.f32 0.0, %v1075
        %1077 = vdwg.mxu0
        %v1078 = vadd.f32 %v979, %v1076
        %s1079 = scalar_lea.vmem %s1, 24
        %v1080 = vld [vmem:[%s1079] sm:$0xff]
        %v1082 = vsel %vm306, %v1080, 0
        %1084 = vmatpush.xpose.msra.mxu0 %v791
        %1085 = vmatpush.xpose.msra.mxu0 %v788
        %1086 = vmatpush.xpose.msra.mxu0 %v785
        %1087 = vmatpush.xpose.msra.mxu0 %v782
        %1088 = vmatpush.xpose.msra.mxu0 %v779
        %1089 = vmatpush.xpose.msra.mxu0 %v776
        %1090 = vmatpush.xpose.msra.mxu0 %v773
        %1091 = vmatpush.xpose.msra.mxu0 %v770
        %1092 = vmatpush.xpose.msra.mxu0 %v767
        %1093 = vmatpush.xpose.msra.mxu0 %v764
        %1094 = vmatpush.xpose.msra.mxu0 %v761
        %1095 = vmatpush.xpose.msra.mxu0 %v758
        %1096 = vmatpush.xpose.msra.mxu0 %v755
        %1097 = vmatpush.xpose.msra.mxu0 %v752
        %1098 = vmatpush.xpose.msra.mxu0 %v749
        %1099 = vmatpush.xpose.msra.mxu0 %v746
        %1100 = vmatmul.f32.gmra.mxu0 %v1082
        %v1101 = vpop.f32.mrf.mxu0
        %v1102 = vadd.f32 0.0, %v1101
        %1103 = vdwg.mxu0
        %v1104 = vsel %vm740, %v1102, -inf
        %1105 = vmax.xlane.f32.xlu0 %v1104
        %v1106 = vpop.xlane.xlu0 %1105
        %v1107 = vsub.f32 %v1104, %v1106
        %v1108 = vmul.f32 %v1107, 1.442695
        %v1109 = vpow.pop %v1108
        %1110 = vadd.xlane.f32.xlu0 %v1109
        %v1111 = vpop.xlane.xlu0 %1110
        %v1112 = vrcp.pop %v1111
        %v1113 = vmul.f32 %v1111, %v1112
        %v1114 = vsub.f32 1.0, %v1113
        %v1115 = vmul.f32 %v1112, %v1114
        %v1116 = vadd.f32 %v1112, %v1115
        %vm1117 = vweird.f32 %v1111
        %vm1118 = vweird.f32 %v1112
        %vm1119 = vmor %vm1117, %vm1118
        %v1120 = vsel %vm1119, %v1112, %v1116
        %v1121 = vand.u32 2147483647, %v1111
        %vm1122 = vcmp.eq.f32.partialorder %v1121, 8.507059e+37
        %v1123 = vand.u32 %v1111, 2147483648
        %v1124 = vor.u32 1.1754944e-38, %v1123
        %v1125 = vsel %vm1122, %v1124, %v1120
        %v1126 = vmul.f32 %v1109, %v1125
        %v1127 = vadd.f32 %v1029, %v1126
        %1128 = vmatpush.msra.mxu0 %v737
        %1129 = vmatpush.msra.mxu0 %v736
        %1130 = vmatpush.msra.mxu0 %v735
        %1131 = vmatpush.msra.mxu0 %v734
        %1132 = vmatpush.msra.mxu0 %v733
        %1133 = vmatpush.msra.mxu0 %v732
        %1134 = vmatpush.msra.mxu0 %v731
        %1135 = vmatpush.msra.mxu0 %v730
        %1136 = vmatpush.msra.mxu0 %v729
        %1137 = vmatpush.msra.mxu0 %v728
        %1138 = vmatpush.msra.mxu0 %v727
        %1139 = vmatpush.msra.mxu0 %v726
        %1140 = vmatpush.msra.mxu0 %v725
        %1141 = vmatpush.msra.mxu0 %v724
        %1142 = vmatpush.msra.mxu0 %v723
        %1143 = vmatpush.msra.mxu0 %v722
        %1144 = vmatmul.f32.gmra.mxu0 %v1126
        %v1145 = vpop.f32.mrf.mxu0
        %v1146 = vadd.f32 0.0, %v1145
        %1147 = vdwg.mxu0
        %s1148 = scalar_lea.vmem %s4, 96
        %v1149 = vld [vmem:[%s1148] sm:$0xff]
        %v1150 = vld [vmem:[%s1148 + $0x8] sm:$0xff]
        %v1151 = vld [vmem:[%s1148 + $0x10] sm:$0xff]
        %v1152 = vld [vmem:[%s1148 + $0x18] sm:$0xff]
        %v1154 = vsel %vm306, %v1146, 0
        %1156 = vmatpush.msra.mxu0 0.0
        %1157 = vmatpush.msra.mxu0 0.0
        %1158 = vmatpush.msra.mxu0 0.0
        %1159 = vmatpush.msra.mxu0 0.0
        %1160 = vmatpush.msra.mxu0 0.0
        %1161 = vmatpush.msra.mxu0 0.0
        %1162 = vmatpush.msra.mxu0 0.0
        %1163 = vmatpush.msra.mxu0 0.0
        %1164 = vmatpush.msra.mxu0 0.0
        %1165 = vmatpush.msra.mxu0 0.0
        %1166 = vmatpush.msra.mxu0 0.0
        %1167 = vmatpush.msra.mxu0 0.0
        %1168 = vmatpush.msra.mxu0 %v1152
        %1169 = vmatpush.msra.mxu0 %v1151
        %1170 = vmatpush.msra.mxu0 %v1150
        %1171 = vmatpush.msra.mxu0 %v1149
        %1172 = vmatmul.f32.gmra.mxu0 %v1154
        %v1173 = vpop.f32.mrf.mxu0
        %v1174 = vadd.f32 0.0, %v1173
        %1175 = vdwg.mxu0
        %v1176 = vadd.f32 %v1078, %v1174
        %v1177 = vmul.f32 %v1127, 0.25
        %v1178 = vld [vmem:[%s5] sm:$0x1]
        %v1180 = vperm.slane %v1178, 0
        %v1182 = vadd.f32 %v1176, %v1180
        %1183 = vst.msk [vmem:[%s276] sm:$0xff] %vm306, %v1182
        %1184 = vst [vmem:[%s283] sm:$0xff] %v1177
        %s1185 = sand.u32 %s164, 1
        %s1186 = scalar_lea.sflag [#allocation3], %s1185
        %s1187 = sand.u32 %s164, 1
        %s1188 = smul.addr %s1187, 8
        %s1189 = scalar_lea.vmem [#allocation2], %s1188
        %s1190 = sand.u32 %s190, 1
        %s1191 = scalar_lea.sflag [#allocation5], %s1190
        %s1192 = sand.u32 %s190, 1
        %s1193 = smul.addr %s1192, 8
        %s1194 = scalar_lea.vmem [#allocation4], %s1193
        // Predicated region
        $region45: #{tpu_custom_call.1} parent=43 // pred_check
          %p1195 = pneg %p174
        $region46: #{tpu_custom_call.1} parent=43 // pred_check_branch
          %1197 = sbr.rel (%p1195) target = $region48
        $region47: #{tpu_custom_call.1} parent=43 // pred_region
          %1199 = vsyncadd %s1186, 0
          %s1200 = smul.addr %s25, 8
          %s1201 = scalar_lea.hbm %s6, %s1200
          %s1203 = sshll.u32 %s1189, 4
          %s1204 = int_to_ptr.vmem [resolvable:$true] %s1203
          %s1205 = sshll.u32 %s1201, 4
          %s1206 = int_to_ptr.hbm [resolvable:$true] %s1205
          %1208 = dma.vmem_to_hbm [thread:$0]  %s1204, 128, %s1206, %s1186
        $region48: #{tpu_custom_call.1} parent=43 // pred_fallthru
          _
        // Predicated region
        $region49: #{tpu_custom_call.1} parent=43 // pred_check
          %p1209 = pneg %p200
        $region50: #{tpu_custom_call.1} parent=43 // pred_check_branch
          %1211 = sbr.rel (%p1209) target = $region52
        $region51: #{tpu_custom_call.1} parent=43 // pred_region
          %1213 = vsyncadd %s1191, 0
          %s1214 = smul.addr %s25, 8
          %s1215 = scalar_lea.hbm %s7, %s1214
          %s1217 = sshll.u32 %s1194, 4
          %s1218 = int_to_ptr.vmem [resolvable:$true] %s1217
          %s1219 = sshll.u32 %s1215, 4
          %s1220 = int_to_ptr.hbm [resolvable:$true] %s1219
          %1222 = dma.vmem_to_hbm [thread:$0]  %s1218, 128, %s1220, %s1191
        $region52: #{tpu_custom_call.1} parent=43 // pred_fallthru
          _
      $region44: #{tpu_custom_call.1} parent=5 // pred_fallthru
        _
      %p1223 = scmp.le.s32.totalorder 2, %s20
      // Predicated region
      $region53: #{tpu_custom_call.1} parent=5 // pred_check
        %p1224 = pneg %p1223
      $region54: #{tpu_custom_call.1} parent=5 // pred_check_branch
        %1226 = sbr.rel (%p1224) target = $region56
      $region55: #{tpu_custom_call.1} parent=5 // pred_region
        %s1227 = ssub.s32 %s20, 2
        // Predicated region
        $region57: #{tpu_custom_call.1} parent=55 // pred_check
          %p1228 = pneg %p180
        $region58: #{tpu_custom_call.1} parent=55 // pred_check_branch
          %1230 = sbr.rel (%p1228) target = $region60
        $region59: #{tpu_custom_call.1} parent=55 // pred_region
          %s1231 = sand.u32 %s165, 1
          %s1232 = scalar_lea.sflag [#allocation3], %s1231
          %s1233 = sand.u32 %s165, 1
          %s1234 = smul.addr %s1233, 8
          %s1235 = scalar_lea.vmem [#allocation2], %s1234
          %1237 = dma.done %s1232, 128
        $region60: #{tpu_custom_call.1} parent=55 // pred_fallthru
          _
        // Predicated region
        $region61: #{tpu_custom_call.1} parent=55 // pred_check
          %p1238 = pneg %p206
        $region62: #{tpu_custom_call.1} parent=55 // pred_check_branch
          %1240 = sbr.rel (%p1238) target = $region64
        $region63: #{tpu_custom_call.1} parent=55 // pred_region
          %s1241 = sand.u32 %s191, 1
          %s1242 = scalar_lea.sflag [#allocation5], %s1241
          %s1243 = sand.u32 %s191, 1
          %s1244 = smul.addr %s1243, 8
          %s1245 = scalar_lea.vmem [#allocation4], %s1244
          %1247 = dma.done %s1242, 128
        $region64: #{tpu_custom_call.1} parent=55 // pred_fallthru
          _
      $region56: #{tpu_custom_call.1} parent=5 // pred_fallthru
        _
    $region6: #{tpu_custom_call.1} parent=1 // loop_footer
      %s24 = sadd.s32 1, %s20
    $region7: #{tpu_custom_call.1} parent=1 // loop_footer_branch
      %19 = sbr.rel target = $region3
    $region8: #{tpu_custom_call.1} parent=1 // loop_exit
      _
    %1248 = vsyncpa [#allocation3], 1
    %s1249 = scalar_lea.sflag [#allocation3], 1
    %1250 = vsyncpa %s1249, 1
    %1251 = vsyncpa [#allocation5], 1
    %s1252 = scalar_lea.sflag [#allocation5], 1
    %1253 = vsyncpa %s1252, 1

</llo_original>
